<compile_context>
chip_gen: v6e
topology: v6e:2x2x1
jax: 0.10.0
libtpu: 0.0.40
codegen_flags: <defaults>
</compile_context>

<pallas_src>
import numpy as np
import jax
import jax.numpy as jnp
from jax import lax
from jax.experimental import pallas as pl
from jax.experimental.pallas import tpu as pltpu

DIM = 16            # embedding_dim
NUM_EMB = 11        # embedding table rows
NUM_EMB_PAD = 16    # table padded (zero rows) to a clean MXU contraction size
POS_BLOCK = 16      # unique positions per kernel-1 grid step (16*dim = 256 lanes)
TOK_BLOCK = 128     # tokens per kernel-2 grid step (lane axis of the output slab)

HIGHEST = jax.lax.Precision.HIGHEST


def pos_to_path(idx: int) -> list:
    # mirrors BinaryPathEncoder.pos_to_path (pos 0 and pos 1 -> empty path)
    if idx <= 1:
        return []
    return [idx % 2] + pos_to_path(idx // 2)


# ------------- Pallas kernel 1: batched binary-path positional encodings -------------

def _path_encode_kernel(bits_ref, prims_ref, init_ref, out_ref):
    # bits_ref : (L, T*dim) int32 — bits_ref[s, u*dim + j] = path bit of position u at depth s
    #            (0 = left, 1 = right, 2 = pad/identity), replicated over j (lane block of u).
    # prims_ref: (2, dim, dim) f32 — [P0, P1] = matrix_exp of the skew-symmetric params.
    # init_ref : (dim, T*dim) f32 — identity tiled T times along lanes.
    # out_ref  : (dim, T*dim) f32 — column block u holds PE_u^T (lane-dense slab).
    L = bits_ref.shape[0]
    p0 = prims_ref[0]
    p1 = prims_ref[1]
    bits = bits_ref[...]

    # torch update: maps <- maps @ P_b^T  <=>  transposed: acc <- P_b @ acc
    acc = init_ref[...]
    for step in range(L):                                    # static, fully unrolled
        prod0 = jnp.dot(p0, acc, preferred_element_type=jnp.float32, precision=HIGHEST)
        prod1 = jnp.dot(p1, acc, preferred_element_type=jnp.float32, precision=HIGHEST)
        b = bits[step:step + 1, :]                           # (1, T*dim)
        acc = jnp.where(b == 0, prod0, jnp.where(b == 1, prod1, acc))
    out_ref[...] = acc


def path_encode(bits_exp, prims, init_tiled, dim, pos_block):
    L, UD = bits_exp.shape                                   # UD = U_pad * dim
    td = pos_block * dim
    return pl.pallas_call(
        _path_encode_kernel,
        out_shape=jax.ShapeDtypeStruct((dim, UD), jnp.float32),
        grid_spec=pltpu.PrefetchScalarGridSpec(
            num_scalar_prefetch=0,
            grid=(UD // td,),
            in_specs=[
                pl.BlockSpec((L, td), lambda i: (0, i)),
                pl.BlockSpec((2, dim, dim), lambda i: (0, 0, 0)),
                pl.BlockSpec((dim, td), lambda i: (0, 0)),
            ],
            out_specs=pl.BlockSpec((dim, td), lambda i: (0, i)),
        ),
        compiler_params=pltpu.CompilerParams(dimension_semantics=("parallel",)),
    )(bits_exp, prims, init_tiled)


# ------------- Pallas kernel 2: batched per-token content-embedding assembly ---------

def _token_embed_kernel(types_ref, values_ref, va_ref, pebT_ref, embT_ref, out_ref):
    # types_ref/values_ref : (1, TB) int32 — token type / value, tokens on lanes.
    # va_ref   : (dim, TB) f32 — (emb[8] @ PE_a^T) per token (deBruijn left factor).
    # pebT_ref : (dim, dim, TB) f32 — pebT[k, j, t] = PE_b(t)[j, k].
    # embT_ref : (dim, NUM_EMB_PAD) f32 — transposed, zero-padded embedding table.
    # out_ref  : (dim, TB) f32 — transposed content embeddings (lane-dense slab).
    t = types_ref[...]
    v = values_ref[...]
    tb = t.shape[1]
    ne = embT_ref.shape[1]

    is_sos = t == 0
    is_bop = t == 1
    is_nop = t == 2
    is_oos = (t == 3) & (v == -1)
    is_db = t == 4

    idx = jnp.where(is_sos, 0,
          jnp.where(is_bop, v + 1,
          jnp.where(is_nop, v + 5,
          jnp.where(is_oos, 10, 0))))
    idx = jnp.clip(idx, 0, NUM_EMB - 1)                      # guard OOB table rows

    # one-hot embedding-table lookup as a single MXU matmul
    rows = lax.broadcasted_iota(jnp.int32, (ne, tb), 0)      # (NE_PAD, TB)
    onehot = (rows == idx).astype(jnp.float32)
    table = jnp.dot(embT_ref[...], onehot,
                    preferred_element_type=jnp.float32)      # (dim, TB)

    # deBruijn: content[t] = emb[8] @ PE_a^T @ PE_b = va[:, t] . PE_b(t)
    # (pure VPU multiply + sublane-reduce, f32 throughout)
    db = jnp.sum(va_ref[...][None, :, :] * pebT_ref[...], axis=1)   # (dim, TB)

    use_table = (is_sos | is_bop | is_nop | is_oos).astype(jnp.float32)   # (1, TB)
    w_db = is_db.astype(jnp.float32)                                      # (1, TB)
    out_ref[...] = use_table * table + w_db * db


# ---------------- wrapper (glue: unique/inverse, path words, bucketize, gathers) ------

def token_embedding_forward(dense_batch, primitives, emb_table, dim=DIM,
                            pos_block=POS_BLOCK, tok_block=TOK_BLOCK):
    token_types, token_values, node_positions = [np.asarray(a) for a in dense_batch]
    B, S = token_types.shape
    N = B * S

    # host-side glue (the torch module also does .cpu().tolist() + dict recursion here)
    uniq, inverse = np.unique(node_positions, return_inverse=True)
    inverse = inverse.reshape(-1).astype(np.int32)
    U = len(uniq)
    U_pad = max(pos_block, -(-U // pos_block) * pos_block)
    paths = [pos_to_path(int(p)) for p in uniq]
    L = max(1, max((len(p) for p in paths), default=0))
    path_words = np.full((U_pad, L), 2, dtype=np.int32)          # 2 = pad (identity)
    for k, p in enumerate(paths):
        path_words[k, :len(p)] = p
    # replicate each position's bits across that position's dim-wide lane block
    bits_exp = np.repeat(path_words.T, dim, axis=1).astype(np.int32)     # (L, U_pad*dim)
    init_tiled = np.tile(np.eye(dim, dtype=np.float32), (1, pos_block))  # (dim, pos_block*dim)

    # ---- kernel 1: PE_u^T for every unique position (lane-dense slabs) ----
    accT = path_encode(jnp.asarray(bits_exp), primitives, jnp.asarray(init_tiled),
                       dim, pos_block)                           # (dim, U_pad*dim)
    peT = accT.reshape(dim, U_pad, dim).transpose(1, 0, 2)       # (U_pad, dim, dim) = PE^T
    pe = peT.transpose(0, 2, 1)                                  # (U_pad, dim, dim) = PE
    # deBruijn left factor per unique position: v[u] = emb[8] @ PE_u^T  (tiny, keep exact f32)
    v = jnp.matmul(emb_table[8], accT, precision=HIGHEST).reshape(U_pad, dim)

    # torch.bucketize(token_values, unique_paths) — exact matches for db tokens
    bkt = np.clip(np.searchsorted(uniq, token_values.reshape(-1)), 0, U - 1).astype(np.int32)

    # ---- pad token axis to a multiple of the token block ----
    N_pad = max(tok_block, -(-N // tok_block) * tok_block)
    types_f = np.full((N_pad,), 5, np.int32)                     # pad type -> zero content
    values_f = np.zeros((N_pad,), np.int32)
    inv_p = np.zeros((N_pad,), np.int32)
    bkt_p = np.zeros((N_pad,), np.int32)
    types_f[:N] = token_types.reshape(-1)
    values_f[:N] = token_values.reshape(-1)
    inv_p[:N] = inverse
    bkt_p[:N] = bkt

    # XLA gathers (token-major) + transposes to lane-dense token-on-lanes layouts; keeps the
    # PE table out of kernel-2 VMEM (O(1) VMEM per step — matters on v7x's 64 MiB).
    v_aT = jnp.take(v, jnp.asarray(inv_p), axis=0).T                      # (dim, N_pad)
    pebT = jnp.take(peT, jnp.asarray(bkt_p), axis=0).transpose(1, 2, 0)   # (dim, dim, N_pad)
    types_row = jnp.asarray(types_f).reshape(1, N_pad)
    values_row = jnp.asarray(values_f).reshape(1, N_pad)
    embT_p = jnp.zeros((dim, NUM_EMB_PAD), jnp.float32).at[:, :NUM_EMB].set(emb_table.T)

    contentT = pl.pallas_call(
        _token_embed_kernel,
        out_shape=jax.ShapeDtypeStruct((dim, N_pad), jnp.float32),
        grid_spec=pltpu.PrefetchScalarGridSpec(
            num_scalar_prefetch=0,
            grid=(N_pad // tok_block,),
            in_specs=[
                pl.BlockSpec((1, tok_block), lambda i: (0, i)),
                pl.BlockSpec((1, tok_block), lambda i: (0, i)),
                pl.BlockSpec((dim, tok_block), lambda i: (0, i)),
                pl.BlockSpec((dim, dim, tok_block), lambda i: (0, 0, i)),
                pl.BlockSpec((dim, NUM_EMB_PAD), lambda i: (0, 0)),
            ],
            out_specs=pl.BlockSpec((dim, tok_block), lambda i: (0, i)),
        ),
        compiler_params=pltpu.CompilerParams(dimension_semantics=("parallel",)),
    )(types_row, values_row, v_aT, pebT, embT_p)

    content = contentT.T[:N].reshape(B, S, dim)
    pos = pe[jnp.asarray(inverse)].reshape(B, S, dim, dim)      # pure XLA gather (no kernel stores)
    return content, pos


# ---------------- deterministic parameter init (shapes from __init__) ----------------

def init_params(dim, key):
    k1, k2 = jax.random.split(key)
    # BinaryPathEncoder._primitives : (2, dim, dim)
    base = jax.random.normal(k1, (2, dim, dim), jnp.float32) * 0.1
    skew = base - jnp.transpose(base, (0, 2, 1))                # "hermitian" (real skew)
    primitives = jnp.stack([jax.scipy.linalg.expm(skew[0]),     # matrix_exp
                            jax.scipy.linalg.expm(skew[1])]).astype(jnp.float32)
    # Embedding(11, dim).weight
    emb_table = jax.random.normal(k2, (NUM_EMB, dim), jnp.float32)
    return primitives, emb_table


# ---------------- pure-numpy reference (mirrors torch eval-mode forward) -------------

def reference_forward(dense_batch, primitives, emb_table, dim=DIM):
    tt, tv, npos = [np.asarray(a) for a in dense_batch]
    B, S = tt.shape
    uniq, inv = np.unique(npos, return_inverse=True)
    inv = inv.reshape(B, S)
    P = np.asarray(primitives, dtype=np.float32)
    pe = []
    for p in uniq:
        m = np.eye(dim, dtype=np.float32)
        for b in pos_to_path(int(p)):
            m = m @ P[b].T
        pe.append(m)
    pe = np.stack(pe)
    E = np.asarray(emb_table, dtype=np.float32)
    content = np.zeros((B, S, dim), np.float32)
    for b in range(B):
        for s in range(S):
            t, v = int(tt[b, s]), int(tv[b, s])
            if t == 0:
                content[b, s] = E[0]
            elif t == 1:
                content[b, s] = E[v + 1]
            elif t == 2:
                content[b, s] = E[v + 5]
            elif t == 3 and v == -1:
                content[b, s] = E[10]
            elif t == 4:
                j = int(np.searchsorted(uniq, v))
                content[b, s] = E[8] @ (pe[inv[b, s]].T @ pe[j])
    return content, pe[inv]


if __name__ == "__main__":
    key = jax.random.PRNGKey(0)
    primitives, emb_table = init_params(DIM, key)

    # dense_batch = (token_types, token_values, node_positions), each (B=2, S=8)
    token_types = np.array([[0, 1, 2, 4, 3, 3, 1, 2],
                            [0, 1, 4, 2, 3, 4, 1, 2]], dtype=np.int32)
    token_values = np.array([[0, 2, 1, 2, -1, 7, 0, 0],
                             [0, 3, 4, 2, -1, 6, 1, 0]], dtype=np.int32)
    node_positions = np.array([[1, 2, 3, 4, 5, 6, 7, 2],
                               [1, 2, 3, 6, 7, 1, 4, 5]], dtype=np.int32)
    dense_batch = np.stack([token_types, token_values, node_positions])  # (3, 2, 8)

    content, pos = token_embedding_forward(dense_batch, primitives, emb_table, DIM)
    content = jax.block_until_ready(content)
    pos = jax.block_until_ready(pos)

    ref_content, ref_pos = reference_forward(dense_batch,
                                             np.asarray(primitives),
                                             np.asarray(emb_table), DIM)
    # PE chain is computed at HIGHEST precision; only the one-hot table lookup uses default
    # MXU precision (bf16 inputs, f32 accumulate) -> generous tolerance still applies.
    np.testing.assert_allclose(np.asarray(content), ref_content, atol=2e-2, rtol=2e-2)
    np.testing.assert_allclose(np.asarray(pos), ref_pos, atol=2e-2, rtol=2e-2)

    print("KERNEL_OK")
</pallas_src>

<mosaic_0001>
module attributes {stable_mosaic.version = 11 : i64} {
  func.func @_path_encode_kernel(%arg0: i32, %arg1: memref<2x256xi32, #tpu.memory_space<vmem>>, %arg2: memref<2x16x16xf32, #tpu.memory_space<vmem>>, %arg3: memref<16x256xf32, #tpu.memory_space<vmem>>, %arg4: memref<16x256xf32, #tpu.memory_space<vmem>>) attributes {dimension_semantics = [#tpu.dimension_semantics<parallel>], iteration_bounds = array<i64: 1>, scalar_prefetch = 0 : i64, scratch_operands = 0 : i64, tpu.core_type = #tpu.core_type<tc>, window_params = [{transform_indices = @transform_0, window_bounds = array<i64: 2, 256>}, {pipeline_mode = #tpu.pipeline_mode<synchronous>, transform_indices = @transform_1, window_bounds = array<i64: 2, 16, 16>}, {pipeline_mode = #tpu.pipeline_mode<synchronous>, transform_indices = @transform_2, window_bounds = array<i64: 16, 256>}, {transform_indices = @transform_3, window_bounds = array<i64: 16, 256>}]} {
    %c0 = arith.constant 0 : index
    %c0_0 = arith.constant 0 : index
    %c0_1 = arith.constant 0 : index
    %0 = vector.load %arg2[%c0, %c0_0, %c0_1] : memref<2x16x16xf32, #tpu.memory_space<vmem>>, vector<1x16x16xf32>
    %1 = vector.shape_cast %0 : vector<1x16x16xf32> to vector<16x16xf32>
    %c1 = arith.constant 1 : index
    %c0_2 = arith.constant 0 : index
    %c0_3 = arith.constant 0 : index
    %2 = vector.load %arg2[%c1, %c0_2, %c0_3] : memref<2x16x16xf32, #tpu.memory_space<vmem>>, vector<1x16x16xf32>
    %3 = vector.shape_cast %2 : vector<1x16x16xf32> to vector<16x16xf32>
    %c0_4 = arith.constant 0 : index
    %c0_5 = arith.constant 0 : index
    %4 = vector.load %arg1[%c0_4, %c0_5] : memref<2x256xi32, #tpu.memory_space<vmem>>, vector<2x256xi32>
    %c0_6 = arith.constant 0 : index
    %c0_7 = arith.constant 0 : index
    %5 = vector.load %arg3[%c0_6, %c0_7] : memref<16x256xf32, #tpu.memory_space<vmem>>, vector<16x256xf32>
    %cst = arith.constant dense<0.000000e+00> : vector<16x256xf32>
    %6 = tpu.matmul %1, %5, %cst {dimension_numbers = #tpu.dot_dimension_numbers<[1], [0], [0], [1], [0, 0, 1, 1], [], []>, precision = #tpu.contract_precision<fp32>} : vector<16x16xf32>, vector<16x256xf32>, vector<16x256xf32> -> vector<16x256xf32>
    %cst_8 = arith.constant dense<0.000000e+00> : vector<16x256xf32>
    %7 = tpu.matmul %3, %5, %cst_8 {dimension_numbers = #tpu.dot_dimension_numbers<[1], [0], [0], [1], [0, 0, 1, 1], [], []>, precision = #tpu.contract_precision<fp32>} : vector<16x16xf32>, vector<16x256xf32>, vector<16x256xf32> -> vector<16x256xf32>
    %8 = vector.extract_strided_slice %4 {offsets = [0, 0], sizes = [1, 256], strides = [1, 1]} : vector<2x256xi32> to vector<1x256xi32>
    %c0_i32 = arith.constant 0 : i32
    %9 = vector.broadcast %c0_i32 : i32 to vector<1x256xi32>
    %10 = arith.cmpi eq, %8, %9 : vector<1x256xi32>
    %c1_i32 = arith.constant 1 : i32
    %11 = vector.broadcast %c1_i32 : i32 to vector<1x256xi32>
    %12 = arith.cmpi eq, %8, %11 : vector<1x256xi32>
    %13 = vector.shape_cast %12 : vector<1x256xi1> to vector<1x256xi1>
    %14 = vector.broadcast %13 : vector<1x256xi1> to vector<16x256xi1>
    %15 = arith.select %14, %7, %5 : vector<16x256xi1>, vector<16x256xf32>
    %16 = vector.shape_cast %10 : vector<1x256xi1> to vector<1x256xi1>
    %17 = vector.broadcast %16 : vector<1x256xi1> to vector<16x256xi1>
    %18 = arith.select %17, %6, %15 : vector<16x256xi1>, vector<16x256xf32>
    %cst_9 = arith.constant dense<0.000000e+00> : vector<16x256xf32>
    %19 = tpu.matmul %1, %18, %cst_9 {dimension_numbers = #tpu.dot_dimension_numbers<[1], [0], [0], [1], [0, 0, 1, 1], [], []>, precision = #tpu.contract_precision<fp32>} : vector<16x16xf32>, vector<16x256xf32>, vector<16x256xf32> -> vector<16x256xf32>
    %cst_10 = arith.constant dense<0.000000e+00> : vector<16x256xf32>
    %20 = tpu.matmul %3, %18, %cst_10 {dimension_numbers = #tpu.dot_dimension_numbers<[1], [0], [0], [1], [0, 0, 1, 1], [], []>, precision = #tpu.contract_precision<fp32>} : vector<16x16xf32>, vector<16x256xf32>, vector<16x256xf32> -> vector<16x256xf32>
    %21 = vector.extract_strided_slice %4 {offsets = [1, 0], sizes = [1, 256], strides = [1, 1]} : vector<2x256xi32> to vector<1x256xi32>
    %c0_i32_11 = arith.constant 0 : i32
    %22 = vector.broadcast %c0_i32_11 : i32 to vector<1x256xi32>
    %23 = arith.cmpi eq, %21, %22 : vector<1x256xi32>
    %c1_i32_12 = arith.constant 1 : i32
    %24 = vector.broadcast %c1_i32_12 : i32 to vector<1x256xi32>
    %25 = arith.cmpi eq, %21, %24 : vector<1x256xi32>
    %26 = vector.shape_cast %25 : vector<1x256xi1> to vector<1x256xi1>
    %27 = vector.broadcast %26 : vector<1x256xi1> to vector<16x256xi1>
    %28 = arith.select %27, %20, %18 : vector<16x256xi1>, vector<16x256xf32>
    %29 = vector.shape_cast %23 : vector<1x256xi1> to vector<1x256xi1>
    %30 = vector.broadcast %29 : vector<1x256xi1> to vector<16x256xi1>
    %31 = arith.select %30, %19, %28 : vector<16x256xi1>, vector<16x256xf32>
    %c0_13 = arith.constant 0 : index
    %c0_14 = arith.constant 0 : index
    %32 = vector.load %arg4[%c0_13, %c0_14] : memref<16x256xf32, #tpu.memory_space<vmem>>, vector<16x256xf32>
    tpu.vector_store %arg4[%c0_13, %c0_14], %31 {strides = array<i32>} : memref<16x256xf32, #tpu.memory_space<vmem>>, vector<16x256xf32>,
    return
  }
  func.func @transform_0(%arg0: i32) -> (i32, i32) {
    %c0_i32 = arith.constant 0 : i32
    %c0_i32_0 = arith.constant 0 : i32
    return %c0_i32, %arg0 : i32, i32
  }
  func.func @transform_1(%arg0: i32) -> (i32, i32, i32) {
    %c0_i32 = arith.constant 0 : i32
    %c0_i32_0 = arith.constant 0 : i32
    %c0_i32_1 = arith.constant 0 : i32
    %c0_i32_2 = arith.constant 0 : i32
    return %c0_i32, %c0_i32_0, %c0_i32_1 : i32, i32, i32
  }
  func.func @transform_2(%arg0: i32) -> (i32, i32) {
    %c0_i32 = arith.constant 0 : i32
    %c0_i32_0 = arith.constant 0 : i32
    %c0_i32_1 = arith.constant 0 : i32
    return %c0_i32, %c0_i32_0 : i32, i32
  }
  func.func @transform_3(%arg0: i32) -> (i32, i32) {
    %c0_i32 = arith.constant 0 : i32
    %c0_i32_0 = arith.constant 0 : i32
    return %c0_i32, %arg0 : i32, i32
  }
}

</mosaic_0001>

<llo_original>
// kernel: tpu_custom_call.1
$region0: #{tpu_custom_call.1}
  #allocation0 [shape = 'u32[]', space=smem, size = 0x4, offset = 0x4, fixed_abs, tag = 'smem constant byte address 0x4 - core index']
  #allocation1 [shape = 'u32[144,128]{1,0:T(1,128)}', space=vmem, size = 0x12000, scoped, tag = 'internal scratch']
  %s0 = inlined_call_operand.hbm [shape: s32[2,256], index: 0, kind: input, shape index: {}]
  %s1 = inlined_call_operand.hbm [shape: f32[2,16,16], index: 1, kind: input, shape index: {}]
  %s2 = inlined_call_operand.hbm [shape: f32[16,256], index: 2, kind: input, shape index: {}]
  %s3 = inlined_call_operand.hbm [shape: f32[16,256], index: 3, kind: output, shape index: {}]
  %s4 = sld [smem:[#allocation0]]
  $region34: #{tpu_custom_call.1} parent=0
    _
  %s6 = ssub.s32 1, %s4
  %s7 = scalar_select 0, %s6, %s4
  $region1: #{tpu_custom_call.1} parent=0
    #allocation2 [shape = 'u8[2048]{0}', space=vmem, size = 0x800, scoped, tag = 'input window, operand 0, single buffered']
    #allocation3 [shape = 's32[1]{0}', space=sflag, size = 0x4, scoped, tag = 'scoped memory for tpu_custom_call.1']
    #allocation4 [shape = 's32[1]{0}', space=sflag, size = 0x4, scoped, tag = 'scoped memory for tpu_custom_call.1']
    #allocation5 [shape = 'u8[16384]{0}', space=vmem, size = 0x4000, scoped, tag = 'input window, operand 1, single buffered']
    #allocation6 [shape = 's32[1]{0}', space=sflag, size = 0x4, scoped, tag = 'scoped memory for tpu_custom_call.1']
    #allocation7 [shape = 'u8[16384]{0}', space=vmem, size = 0x4000, scoped, tag = 'input window, operand 2, single buffered']
    #allocation8 [shape = 'u8[16384]{0}', space=vmem, size = 0x4000, scoped, tag = 'output window, operand 0, single buffered']
    %8 = vsyncpa [#allocation3], 0
    %9 = vsyncpa [#allocation6], 0
    %10 = vsyncpa [#allocation4], 0
    // Predicated region
    $region2: #{tpu_custom_call.1} parent=1 // pred_check
      _
    $region3: #{tpu_custom_call.1} parent=1 // pred_check_branch
      %12 = sbr.rel (0) target = $region5
    $region4: #{tpu_custom_call.1} parent=1 // pred_region
      %s14 = ssub.s32 64, 64
      %15 = vsyncadd [#allocation3], %s14
      %s17 = sshll.u32 [#allocation2], 4
      %s18 = int_to_ptr.vmem [resolvable:$true] %s17
      %20 = dma.hbm_to_vmem [thread:$0]  %s0, 64, %s18, [#allocation3]
    $region5: #{tpu_custom_call.1} parent=1 // pred_fallthru
      _
    // Predicated region
    $region6: #{tpu_custom_call.1} parent=1 // pred_check
      _
    $region7: #{tpu_custom_call.1} parent=1 // pred_check_branch
      %22 = sbr.rel (0) target = $region9
    $region8: #{tpu_custom_call.1} parent=1 // pred_region
      %s24 = ssub.s32 512, 512
      %25 = vsyncadd [#allocation6], %s24
      %s26 = sshll.u32 [#allocation5], 4
      %s27 = int_to_ptr.vmem [resolvable:$true] %s26
      %32 = dma.hbm_to_vmem [thread:$0]  %s1, 512, %s27, [#allocation6], 128, 128, 8
    $region9: #{tpu_custom_call.1} parent=1 // pred_fallthru
      _
    // Predicated region
    $region10: #{tpu_custom_call.1} parent=1 // pred_check
      _
    $region11: #{tpu_custom_call.1} parent=1 // pred_check_branch
      %34 = sbr.rel (0) target = $region13
    $region12: #{tpu_custom_call.1} parent=1 // pred_region
      %s36 = ssub.s32 512, 512
      %37 = vsyncadd [#allocation6], %s36
      %s38 = sshll.u32 [#allocation7], 4
      %s39 = int_to_ptr.vmem [resolvable:$true] %s38
      %44 = dma.hbm_to_vmem [thread:$0]  %s2, 512, %s39, [#allocation6], 256, 256, 16
    $region13: #{tpu_custom_call.1} parent=1 // pred_fallthru
      _
    // Predicated region
    $region14: #{tpu_custom_call.1} parent=1 // pred_check
      _
    $region15: #{tpu_custom_call.1} parent=1 // pred_check_branch
      %46 = sbr.rel (0) target = $region17
    $region16: #{tpu_custom_call.1} parent=1 // pred_region
      %47 = dma.done [#allocation3], 64
    $region17: #{tpu_custom_call.1} parent=1 // pred_fallthru
      _
    // Predicated region
    $region18: #{tpu_custom_call.1} parent=1 // pred_check
      _
    $region19: #{tpu_custom_call.1} parent=1 // pred_check_branch
      %49 = sbr.rel (0) target = $region21
    $region20: #{tpu_custom_call.1} parent=1 // pred_region
      %50 = dma.done [#allocation6], 512
    $region21: #{tpu_custom_call.1} parent=1 // pred_fallthru
      _
    // Predicated region
    $region22: #{tpu_custom_call.1} parent=1 // pred_check
      _
    $region23: #{tpu_custom_call.1} parent=1 // pred_check_branch
      %52 = sbr.rel (0) target = $region25
    $region24: #{tpu_custom_call.1} parent=1 // pred_region
      %53 = dma.done [#allocation6], 512
    $region25: #{tpu_custom_call.1} parent=1 // pred_fallthru
      _
    %v54 = vld [vmem:[#allocation5] sm:$0xff]
    %v55 = vld [vmem:[#allocation5 + $0x8] sm:$0xff]
    %s56 = scalar_lea.vmem [#allocation5], 16
    %v57 = vld [vmem:[%s56] sm:$0xff]
    %v58 = vld [vmem:[%s56 + $0x8] sm:$0xff]
    %v59 = vld [vmem:[#allocation2] sm:$0xf]
    %v60 = vld [vmem:[#allocation7] sm:$0xff]
    %v61 = vld [vmem:[#allocation7 + $0x8] sm:$0xff]
    %v62 = vld [vmem:[#allocation7 + $0x10] sm:$0xff]
    %v63 = vld [vmem:[#allocation7 + $0x18] sm:$0xff]
    %vm64 = vcmask 130048
    %v66 = vsel %vm64, %v54, 0
    %v69 = vsel %vm64, %v55, 0
    %71 = vmatprep.subr.mxu0 0.0
    %72 = vmatpush1.msra.mxu0 0.0
    %73 = vmatprep.subr.mxu0 0.0
    %74 = vmatpush1.msra.mxu0 0.0
    %75 = vmatprep.subr.mxu0 0.0
    %76 = vmatpush1.msra.mxu0 0.0
    %77 = vmatprep.subr.mxu0 0.0
    %78 = vmatpush1.msra.mxu0 0.0
    %79 = vmatprep.subr.mxu0 0.0
    %80 = vmatpush1.msra.mxu0 0.0
    %81 = vmatprep.subr.mxu0 0.0
    %82 = vmatpush1.msra.mxu0 0.0
    %83 = vmatprep.subr.mxu0 0.0
    %84 = vmatpush1.msra.mxu0 0.0
    %85 = vmatprep.subr.mxu0 0.0
    %86 = vmatpush1.msra.mxu0 0.0
    %87 = vmatprep.subr.mxu0 0.0
    %88 = vmatpush1.msra.mxu0 0.0
    %89 = vmatprep.subr.mxu0 0.0
    %90 = vmatpush1.msra.mxu0 0.0
    %91 = vmatprep.subr.mxu0 0.0
    %92 = vmatpush1.msra.mxu0 0.0
    %93 = vmatprep.subr.mxu0 0.0
    %94 = vmatpush1.msra.mxu0 0.0
    %95 = vmatprep.subr.mxu0 0.0
    %96 = vmatpush1.msra.mxu0 0.0
    %97 = vmatprep.subr.mxu0 0.0
    %98 = vmatpush1.msra.mxu0 0.0
    %v99 = vand.u32 %v63, 4294901760
    %100 = vmatprep.subr.mxu0 %v99
    %v101 = vand.u32 %v62, 4294901760
    %102 = vmatpush1.msra.mxu0 %v101
    %v103 = vand.u32 %v61, 4294901760
    %104 = vmatprep.subr.mxu0 %v103
    %v105 = vand.u32 %v60, 4294901760
    %106 = vmatpush1.msra.mxu0 %v105
    %107 = vmatprep.subr.mxu0 0.0
    %108 = vmatpush2.msra.mxu0 0.0
    %109 = vmatprep.subr.mxu0 0.0
    %110 = vmatpush2.msra.mxu0 0.0
    %111 = vmatprep.subr.mxu0 0.0
    %112 = vmatpush2.msra.mxu0 0.0
    %113 = vmatprep.subr.mxu0 0.0
    %114 = vmatpush2.msra.mxu0 0.0
    %115 = vmatprep.subr.mxu0 0.0
    %116 = vmatpush2.msra.mxu0 0.0
    %117 = vmatprep.subr.mxu0 0.0
    %118 = vmatpush2.msra.mxu0 0.0
    %119 = vmatprep.subr.mxu0 0.0
    %120 = vmatpush2.msra.mxu0 0.0
    %121 = vmatprep.subr.mxu0 0.0
    %122 = vmatpush2.msra.mxu0 0.0
    %123 = vmatprep.subr.mxu0 0.0
    %124 = vmatpush2.msra.mxu0 0.0
    %125 = vmatprep.subr.mxu0 0.0
    %126 = vmatpush2.msra.mxu0 0.0
    %127 = vmatprep.subr.mxu0 0.0
    %128 = vmatpush2.msra.mxu0 0.0
    %129 = vmatprep.subr.mxu0 0.0
    %130 = vmatpush2.msra.mxu0 0.0
    %131 = vmatprep.subr.mxu0 0.0
    %132 = vmatpush2.msra.mxu0 0.0
    %133 = vmatprep.subr.mxu0 0.0
    %134 = vmatpush2.msra.mxu0 0.0
    %135 = vmatprep.subr.mxu0 0.0
    %136 = vmatpush2.msra.mxu0 0.0
    %137 = vmatprep.subr.mxu0 0.0
    %138 = vmatpush2.msra.mxu0 0.0
    %139 = vmatprep.mubr.f32.mxu0 0.0
    %v140 = vand.u32 %v66, 4294901760
    %v141 = vsub.f32 %v66, %v140
    %v142 = vand.u32 %v141, 4294901760
    %v143 = vsub.f32 %v141, %v142
    %v144 = vand.u32 %v143, 4294901760
    %145 = vmatmul.mubr.f32.gmra.mxu0 %v144
    %v146 = vpop.f32.mrf.mxu0
    %v147 = vadd.f32 0.0, %v146
    %v148 = vpop.f32.mrf.mxu0
    %v149 = vadd.f32 0.0, %v148
    %150 = vmatprep.mubr.f32.mxu0 0.0
    %v151 = vand.u32 %v69, 4294901760
    %v152 = vsub.f32 %v69, %v151
    %v153 = vand.u32 %v152, 4294901760
    %v154 = vsub.f32 %v152, %v153
    %v155 = vand.u32 %v154, 4294901760
    %156 = vmatmul.mubr.f32.gmra.mxu0 %v155
    %v157 = vpop.f32.mrf.mxu0
    %v158 = vadd.f32 0.0, %v157
    %v159 = vpop.f32.mrf.mxu0
    %v160 = vadd.f32 0.0, %v159
    %161 = vdwg.mxu0
    %162 = vmatprep.subr.mxu0 0.0
    %163 = vmatpush1.msra.mxu0 0.0
    %164 = vmatprep.subr.mxu0 0.0
    %165 = vmatpush1.msra.mxu0 0.0
    %166 = vmatprep.subr.mxu0 0.0
    %167 = vmatpush1.msra.mxu0 0.0
    %168 = vmatprep.subr.mxu0 0.0
    %169 = vmatpush1.msra.mxu0 0.0
    %170 = vmatprep.subr.mxu0 0.0
    %171 = vmatpush1.msra.mxu0 0.0
    %172 = vmatprep.subr.mxu0 0.0
    %173 = vmatpush1.msra.mxu0 0.0
    %174 = vmatprep.subr.mxu0 0.0
    %175 = vmatpush1.msra.mxu0 0.0
    %176 = vmatprep.subr.mxu0 0.0
    %177 = vmatpush1.msra.mxu0 0.0
    %178 = vmatprep.subr.mxu0 0.0
    %179 = vmatpush1.msra.mxu0 0.0
    %180 = vmatprep.subr.mxu0 0.0
    %181 = vmatpush1.msra.mxu0 0.0
    %182 = vmatprep.subr.mxu0 0.0
    %183 = vmatpush1.msra.mxu0 0.0
    %184 = vmatprep.subr.mxu0 0.0
    %185 = vmatpush1.msra.mxu0 0.0
    %186 = vmatprep.subr.mxu0 0.0
    %187 = vmatpush1.msra.mxu0 0.0
    %188 = vmatprep.subr.mxu0 0.0
    %189 = vmatpush1.msra.mxu0 0.0
    %v190 = vand.u32 %v63, 4294901760
    %v191 = vsub.f32 %v63, %v190
    %v192 = vand.u32 %v191, 4294901760
    %v193 = vsub.f32 %v191, %v192
    %v194 = vand.u32 %v193, 4294901760
    %195 = vmatprep.subr.mxu0 %v194
    %v196 = vand.u32 %v62, 4294901760
    %v197 = vsub.f32 %v62, %v196
    %v198 = vand.u32 %v197, 4294901760
    %v199 = vsub.f32 %v197, %v198
    %v200 = vand.u32 %v199, 4294901760
    %201 = vmatpush1.msra.mxu0 %v200
    %v202 = vand.u32 %v61, 4294901760
    %v203 = vsub.f32 %v61, %v202
    %v204 = vand.u32 %v203, 4294901760
    %v205 = vsub.f32 %v203, %v204
    %v206 = vand.u32 %v205, 4294901760
    %207 = vmatprep.subr.mxu0 %v206
    %v208 = vand.u32 %v60, 4294901760
    %v209 = vsub.f32 %v60, %v208
    %v210 = vand.u32 %v209, 4294901760
    %v211 = vsub.f32 %v209, %v210
    %v212 = vand.u32 %v211, 4294901760
    %213 = vmatpush1.msra.mxu0 %v212
    %214 = vmatprep.subr.mxu0 0.0
    %215 = vmatpush2.msra.mxu0 0.0
    %216 = vmatprep.subr.mxu0 0.0
    %217 = vmatpush2.msra.mxu0 0.0
    %218 = vmatprep.subr.mxu0 0.0
    %219 = vmatpush2.msra.mxu0 0.0
    %220 = vmatprep.subr.mxu0 0.0
    %221 = vmatpush2.msra.mxu0 0.0
    %222 = vmatprep.subr.mxu0 0.0
    %223 = vmatpush2.msra.mxu0 0.0
    %224 = vmatprep.subr.mxu0 0.0
    %225 = vmatpush2.msra.mxu0 0.0
    %226 = vmatprep.subr.mxu0 0.0
    %227 = vmatpush2.msra.mxu0 0.0
    %228 = vmatprep.subr.mxu0 0.0
    %229 = vmatpush2.msra.mxu0 0.0
    %230 = vmatprep.subr.mxu0 0.0
    %231 = vmatpush2.msra.mxu0 0.0
    %232 = vmatprep.subr.mxu0 0.0
    %233 = vmatpush2.msra.mxu0 0.0
    %234 = vmatprep.subr.mxu0 0.0
    %235 = vmatpush2.msra.mxu0 0.0
    %236 = vmatprep.subr.mxu0 0.0
    %237 = vmatpush2.msra.mxu0 0.0
    %238 = vmatprep.subr.mxu0 0.0
    %239 = vmatpush2.msra.mxu0 0.0
    %240 = vmatprep.subr.mxu0 0.0
    %241 = vmatpush2.msra.mxu0 0.0
    %242 = vmatprep.subr.mxu0 0.0
    %243 = vmatpush2.msra.mxu0 0.0
    %244 = vmatprep.subr.mxu0 0.0
    %245 = vmatpush2.msra.mxu0 0.0
    %246 = vmatprep.mubr.f32.mxu0 0.0
    %v247 = vand.u32 %v66, 4294901760
    %248 = vmatmul.mubr.f32.gmra.mxu0 %v247
    %v249 = vpop.f32.mrf.mxu0
    %v250 = vadd.f32 %v147, %v249
    %v251 = vpop.f32.mrf.mxu0
    %v252 = vadd.f32 %v149, %v251
    %253 = vmatprep.mubr.f32.mxu0 0.0
    %v254 = vand.u32 %v69, 4294901760
    %255 = vmatmul.mubr.f32.gmra.mxu0 %v254
    %v256 = vpop.f32.mrf.mxu0
    %v257 = vadd.f32 %v158, %v256
    %v258 = vpop.f32.mrf.mxu0
    %v259 = vadd.f32 %v160, %v258
    %260 = vdwg.mxu0
    %261 = vmatprep.subr.mxu0 0.0
    %262 = vmatpush1.msra.mxu0 0.0
    %263 = vmatprep.subr.mxu0 0.0
    %264 = vmatpush1.msra.mxu0 0.0
    %265 = vmatprep.subr.mxu0 0.0
    %266 = vmatpush1.msra.mxu0 0.0
    %267 = vmatprep.subr.mxu0 0.0
    %268 = vmatpush1.msra.mxu0 0.0
    %269 = vmatprep.subr.mxu0 0.0
    %270 = vmatpush1.msra.mxu0 0.0
    %271 = vmatprep.subr.mxu0 0.0
    %272 = vmatpush1.msra.mxu0 0.0
    %273 = vmatprep.subr.mxu0 0.0
    %274 = vmatpush1.msra.mxu0 0.0
    %275 = vmatprep.subr.mxu0 0.0
    %276 = vmatpush1.msra.mxu0 0.0
    %277 = vmatprep.subr.mxu0 0.0
    %278 = vmatpush1.msra.mxu0 0.0
    %279 = vmatprep.subr.mxu0 0.0
    %280 = vmatpush1.msra.mxu0 0.0
    %281 = vmatprep.subr.mxu0 0.0
    %282 = vmatpush1.msra.mxu0 0.0
    %283 = vmatprep.subr.mxu0 0.0
    %284 = vmatpush1.msra.mxu0 0.0
    %285 = vmatprep.subr.mxu0 0.0
    %286 = vmatpush1.msra.mxu0 0.0
    %287 = vmatprep.subr.mxu0 0.0
    %288 = vmatpush1.msra.mxu0 0.0
    %v289 = vand.u32 %v63, 4294901760
    %v290 = vsub.f32 %v63, %v289
    %291 = vmatprep.subr.mxu0 %v290
    %v292 = vand.u32 %v62, 4294901760
    %v293 = vsub.f32 %v62, %v292
    %294 = vmatpush1.msra.mxu0 %v293
    %v295 = vand.u32 %v61, 4294901760
    %v296 = vsub.f32 %v61, %v295
    %297 = vmatprep.subr.mxu0 %v296
    %v298 = vand.u32 %v60, 4294901760
    %v299 = vsub.f32 %v60, %v298
    %300 = vmatpush1.msra.mxu0 %v299
    %301 = vmatprep.subr.mxu0 0.0
    %302 = vmatpush2.msra.mxu0 0.0
    %303 = vmatprep.subr.mxu0 0.0
    %304 = vmatpush2.msra.mxu0 0.0
    %305 = vmatprep.subr.mxu0 0.0
    %306 = vmatpush2.msra.mxu0 0.0
    %307 = vmatprep.subr.mxu0 0.0
    %308 = vmatpush2.msra.mxu0 0.0
    %309 = vmatprep.subr.mxu0 0.0
    %310 = vmatpush2.msra.mxu0 0.0
    %311 = vmatprep.subr.mxu0 0.0
    %312 = vmatpush2.msra.mxu0 0.0
    %313 = vmatprep.subr.mxu0 0.0
    %314 = vmatpush2.msra.mxu0 0.0
    %315 = vmatprep.subr.mxu0 0.0
    %316 = vmatpush2.msra.mxu0 0.0
    %317 = vmatprep.subr.mxu0 0.0
    %318 = vmatpush2.msra.mxu0 0.0
    %319 = vmatprep.subr.mxu0 0.0
    %320 = vmatpush2.msra.mxu0 0.0
    %321 = vmatprep.subr.mxu0 0.0
    %322 = vmatpush2.msra.mxu0 0.0
    %323 = vmatprep.subr.mxu0 0.0
    %324 = vmatpush2.msra.mxu0 0.0
    %325 = vmatprep.subr.mxu0 0.0
    %326 = vmatpush2.msra.mxu0 0.0
    %327 = vmatprep.subr.mxu0 0.0
    %328 = vmatpush2.msra.mxu0 0.0
    %329 = vmatprep.subr.mxu0 0.0
    %330 = vmatpush2.msra.mxu0 0.0
    %331 = vmatprep.subr.mxu0 0.0
    %332 = vmatpush2.msra.mxu0 0.0
    %333 = vmatprep.mubr.f32.mxu0 0.0
    %v334 = vand.u32 %v66, 4294901760
    %v335 = vsub.f32 %v66, %v334
    %336 = vmatmul.mubr.f32.gmra.mxu0 %v335
    %v337 = vpop.f32.mrf.mxu0
    %v338 = vadd.f32 %v250, %v337
    %v339 = vpop.f32.mrf.mxu0
    %v340 = vadd.f32 %v252, %v339
    %341 = vmatprep.mubr.f32.mxu0 0.0
    %v342 = vand.u32 %v69, 4294901760
    %v343 = vsub.f32 %v69, %v342
    %344 = vmatmul.mubr.f32.gmra.mxu0 %v343
    %v345 = vpop.f32.mrf.mxu0
    %v346 = vadd.f32 %v257, %v345
    %v347 = vpop.f32.mrf.mxu0
    %v348 = vadd.f32 %v259, %v347
    %349 = vdwg.mxu0
    %350 = vmatprep.subr.mxu0 0.0
    %351 = vmatpush1.msra.mxu0 0.0
    %352 = vmatprep.subr.mxu0 0.0
    %353 = vmatpush1.msra.mxu0 0.0
    %354 = vmatprep.subr.mxu0 0.0
    %355 = vmatpush1.msra.mxu0 0.0
    %356 = vmatprep.subr.mxu0 0.0
    %357 = vmatpush1.msra.mxu0 0.0
    %358 = vmatprep.subr.mxu0 0.0
    %359 = vmatpush1.msra.mxu0 0.0
    %360 = vmatprep.subr.mxu0 0.0
    %361 = vmatpush1.msra.mxu0 0.0
    %362 = vmatprep.subr.mxu0 0.0
    %363 = vmatpush1.msra.mxu0 0.0
    %364 = vmatprep.subr.mxu0 0.0
    %365 = vmatpush1.msra.mxu0 0.0
    %366 = vmatprep.subr.mxu0 0.0
    %367 = vmatpush1.msra.mxu0 0.0
    %368 = vmatprep.subr.mxu0 0.0
    %369 = vmatpush1.msra.mxu0 0.0
    %370 = vmatprep.subr.mxu0 0.0
    %371 = vmatpush1.msra.mxu0 0.0
    %372 = vmatprep.subr.mxu0 0.0
    %373 = vmatpush1.msra.mxu0 0.0
    %374 = vmatprep.subr.mxu0 0.0
    %375 = vmatpush1.msra.mxu0 0.0
    %376 = vmatprep.subr.mxu0 0.0
    %377 = vmatpush1.msra.mxu0 0.0
    %v378 = vand.u32 %v63, 4294901760
    %379 = vmatprep.subr.mxu0 %v378
    %v380 = vand.u32 %v62, 4294901760
    %381 = vmatpush1.msra.mxu0 %v380
    %v382 = vand.u32 %v61, 4294901760
    %383 = vmatprep.subr.mxu0 %v382
    %v384 = vand.u32 %v60, 4294901760
    %385 = vmatpush1.msra.mxu0 %v384
    %386 = vmatprep.subr.mxu0 0.0
    %387 = vmatpush2.msra.mxu0 0.0
    %388 = vmatprep.subr.mxu0 0.0
    %389 = vmatpush2.msra.mxu0 0.0
    %390 = vmatprep.subr.mxu0 0.0
    %391 = vmatpush2.msra.mxu0 0.0
    %392 = vmatprep.subr.mxu0 0.0
    %393 = vmatpush2.msra.mxu0 0.0
    %394 = vmatprep.subr.mxu0 0.0
    %395 = vmatpush2.msra.mxu0 0.0
    %396 = vmatprep.subr.mxu0 0.0
    %397 = vmatpush2.msra.mxu0 0.0
    %398 = vmatprep.subr.mxu0 0.0
    %399 = vmatpush2.msra.mxu0 0.0
    %400 = vmatprep.subr.mxu0 0.0
    %401 = vmatpush2.msra.mxu0 0.0
    %402 = vmatprep.subr.mxu0 0.0
    %403 = vmatpush2.msra.mxu0 0.0
    %404 = vmatprep.subr.mxu0 0.0
    %405 = vmatpush2.msra.mxu0 0.0
    %406 = vmatprep.subr.mxu0 0.0
    %407 = vmatpush2.msra.mxu0 0.0
    %408 = vmatprep.subr.mxu0 0.0
    %409 = vmatpush2.msra.mxu0 0.0
    %410 = vmatprep.subr.mxu0 0.0
    %411 = vmatpush2.msra.mxu0 0.0
    %412 = vmatprep.subr.mxu0 0.0
    %413 = vmatpush2.msra.mxu0 0.0
    %414 = vmatprep.subr.mxu0 0.0
    %415 = vmatpush2.msra.mxu0 0.0
    %416 = vmatprep.subr.mxu0 0.0
    %417 = vmatpush2.msra.mxu0 0.0
    %418 = vmatprep.mubr.f32.mxu0 0.0
    %v419 = vand.u32 %v66, 4294901760
    %v420 = vsub.f32 %v66, %v419
    %v421 = vand.u32 %v420, 4294901760
    %422 = vmatmul.mubr.f32.gmra.mxu0 %v421
    %v423 = vpop.f32.mrf.mxu0
    %v424 = vadd.f32 %v338, %v423
    %v425 = vpop.f32.mrf.mxu0
    %v426 = vadd.f32 %v340, %v425
    %427 = vmatprep.mubr.f32.mxu0 0.0
    %v428 = vand.u32 %v69, 4294901760
    %v429 = vsub.f32 %v69, %v428
    %v430 = vand.u32 %v429, 4294901760
    %431 = vmatmul.mubr.f32.gmra.mxu0 %v430
    %v432 = vpop.f32.mrf.mxu0
    %v433 = vadd.f32 %v346, %v432
    %v434 = vpop.f32.mrf.mxu0
    %v435 = vadd.f32 %v348, %v434
    %436 = vdwg.mxu0
    %437 = vmatprep.subr.mxu0 0.0
    %438 = vmatpush1.msra.mxu0 0.0
    %439 = vmatprep.subr.mxu0 0.0
    %440 = vmatpush1.msra.mxu0 0.0
    %441 = vmatprep.subr.mxu0 0.0
    %442 = vmatpush1.msra.mxu0 0.0
    %443 = vmatprep.subr.mxu0 0.0
    %444 = vmatpush1.msra.mxu0 0.0
    %445 = vmatprep.subr.mxu0 0.0
    %446 = vmatpush1.msra.mxu0 0.0
    %447 = vmatprep.subr.mxu0 0.0
    %448 = vmatpush1.msra.mxu0 0.0
    %449 = vmatprep.subr.mxu0 0.0
    %450 = vmatpush1.msra.mxu0 0.0
    %451 = vmatprep.subr.mxu0 0.0
    %452 = vmatpush1.msra.mxu0 0.0
    %453 = vmatprep.subr.mxu0 0.0
    %454 = vmatpush1.msra.mxu0 0.0
    %455 = vmatprep.subr.mxu0 0.0
    %456 = vmatpush1.msra.mxu0 0.0
    %457 = vmatprep.subr.mxu0 0.0
    %458 = vmatpush1.msra.mxu0 0.0
    %459 = vmatprep.subr.mxu0 0.0
    %460 = vmatpush1.msra.mxu0 0.0
    %461 = vmatprep.subr.mxu0 0.0
    %462 = vmatpush1.msra.mxu0 0.0
    %463 = vmatprep.subr.mxu0 0.0
    %464 = vmatpush1.msra.mxu0 0.0
    %v465 = vand.u32 %v63, 4294901760
    %v466 = vsub.f32 %v63, %v465
    %v467 = vand.u32 %v466, 4294901760
    %468 = vmatprep.subr.mxu0 %v467
    %v469 = vand.u32 %v62, 4294901760
    %v470 = vsub.f32 %v62, %v469
    %v471 = vand.u32 %v470, 4294901760
    %472 = vmatpush1.msra.mxu0 %v471
    %v473 = vand.u32 %v61, 4294901760
    %v474 = vsub.f32 %v61, %v473
    %v475 = vand.u32 %v474, 4294901760
    %476 = vmatprep.subr.mxu0 %v475
    %v477 = vand.u32 %v60, 4294901760
    %v478 = vsub.f32 %v60, %v477
    %v479 = vand.u32 %v478, 4294901760
    %480 = vmatpush1.msra.mxu0 %v479
    %481 = vmatprep.subr.mxu0 0.0
    %482 = vmatpush2.msra.mxu0 0.0
    %483 = vmatprep.subr.mxu0 0.0
    %484 = vmatpush2.msra.mxu0 0.0
    %485 = vmatprep.subr.mxu0 0.0
    %486 = vmatpush2.msra.mxu0 0.0
    %487 = vmatprep.subr.mxu0 0.0
    %488 = vmatpush2.msra.mxu0 0.0
    %489 = vmatprep.subr.mxu0 0.0
    %490 = vmatpush2.msra.mxu0 0.0
    %491 = vmatprep.subr.mxu0 0.0
    %492 = vmatpush2.msra.mxu0 0.0
    %493 = vmatprep.subr.mxu0 0.0
    %494 = vmatpush2.msra.mxu0 0.0
    %495 = vmatprep.subr.mxu0 0.0
    %496 = vmatpush2.msra.mxu0 0.0
    %497 = vmatprep.subr.mxu0 0.0
    %498 = vmatpush2.msra.mxu0 0.0
    %499 = vmatprep.subr.mxu0 0.0
    %500 = vmatpush2.msra.mxu0 0.0
    %501 = vmatprep.subr.mxu0 0.0
    %502 = vmatpush2.msra.mxu0 0.0
    %503 = vmatprep.subr.mxu0 0.0
    %504 = vmatpush2.msra.mxu0 0.0
    %505 = vmatprep.subr.mxu0 0.0
    %506 = vmatpush2.msra.mxu0 0.0
    %507 = vmatprep.subr.mxu0 0.0
    %508 = vmatpush2.msra.mxu0 0.0
    %509 = vmatprep.subr.mxu0 0.0
    %510 = vmatpush2.msra.mxu0 0.0
    %511 = vmatprep.subr.mxu0 0.0
    %512 = vmatpush2.msra.mxu0 0.0
    %513 = vmatprep.mubr.f32.mxu0 0.0
    %v514 = vand.u32 %v66, 4294901760
    %515 = vmatmul.mubr.f32.gmra.mxu0 %v514
    %v516 = vpop.f32.mrf.mxu0
    %v517 = vadd.f32 %v424, %v516
    %v518 = vpop.f32.mrf.mxu0
    %v519 = vadd.f32 %v426, %v518
    %520 = vmatprep.mubr.f32.mxu0 0.0
    %v521 = vand.u32 %v69, 4294901760
    %522 = vmatmul.mubr.f32.gmra.mxu0 %v521
    %v523 = vpop.f32.mrf.mxu0
    %v524 = vadd.f32 %v433, %v523
    %v525 = vpop.f32.mrf.mxu0
    %v526 = vadd.f32 %v435, %v525
    %527 = vdwg.mxu0
    %528 = vmatprep.subr.mxu0 0.0
    %529 = vmatpush1.msra.mxu0 0.0
    %530 = vmatprep.subr.mxu0 0.0
    %531 = vmatpush1.msra.mxu0 0.0
    %532 = vmatprep.subr.mxu0 0.0
    %533 = vmatpush1.msra.mxu0 0.0
    %534 = vmatprep.subr.mxu0 0.0
    %535 = vmatpush1.msra.mxu0 0.0
    %536 = vmatprep.subr.mxu0 0.0
    %537 = vmatpush1.msra.mxu0 0.0
    %538 = vmatprep.subr.mxu0 0.0
    %539 = vmatpush1.msra.mxu0 0.0
    %540 = vmatprep.subr.mxu0 0.0
    %541 = vmatpush1.msra.mxu0 0.0
    %542 = vmatprep.subr.mxu0 0.0
    %543 = vmatpush1.msra.mxu0 0.0
    %544 = vmatprep.subr.mxu0 0.0
    %545 = vmatpush1.msra.mxu0 0.0
    %546 = vmatprep.subr.mxu0 0.0
    %547 = vmatpush1.msra.mxu0 0.0
    %548 = vmatprep.subr.mxu0 0.0
    %549 = vmatpush1.msra.mxu0 0.0
    %550 = vmatprep.subr.mxu0 0.0
    %551 = vmatpush1.msra.mxu0 0.0
    %552 = vmatprep.subr.mxu0 0.0
    %553 = vmatpush1.msra.mxu0 0.0
    %554 = vmatprep.subr.mxu0 0.0
    %555 = vmatpush1.msra.mxu0 0.0
    %v556 = vand.u32 %v63, 4294901760
    %557 = vmatprep.subr.mxu0 %v556
    %v558 = vand.u32 %v62, 4294901760
    %559 = vmatpush1.msra.mxu0 %v558
    %v560 = vand.u32 %v61, 4294901760
    %561 = vmatprep.subr.mxu0 %v560
    %v562 = vand.u32 %v60, 4294901760
    %563 = vmatpush1.msra.mxu0 %v562
    %564 = vmatprep.subr.mxu0 0.0
    %565 = vmatpush2.msra.mxu0 0.0
    %566 = vmatprep.subr.mxu0 0.0
    %567 = vmatpush2.msra.mxu0 0.0
    %568 = vmatprep.subr.mxu0 0.0
    %569 = vmatpush2.msra.mxu0 0.0
    %570 = vmatprep.subr.mxu0 0.0
    %571 = vmatpush2.msra.mxu0 0.0
    %572 = vmatprep.subr.mxu0 0.0
    %573 = vmatpush2.msra.mxu0 0.0
    %574 = vmatprep.subr.mxu0 0.0
    %575 = vmatpush2.msra.mxu0 0.0
    %576 = vmatprep.subr.mxu0 0.0
    %577 = vmatpush2.msra.mxu0 0.0
    %578 = vmatprep.subr.mxu0 0.0
    %579 = vmatpush2.msra.mxu0 0.0
    %580 = vmatprep.subr.mxu0 0.0
    %581 = vmatpush2.msra.mxu0 0.0
    %582 = vmatprep.subr.mxu0 0.0
    %583 = vmatpush2.msra.mxu0 0.0
    %584 = vmatprep.subr.mxu0 0.0
    %585 = vmatpush2.msra.mxu0 0.0
    %586 = vmatprep.subr.mxu0 0.0
    %587 = vmatpush2.msra.mxu0 0.0
    %588 = vmatprep.subr.mxu0 0.0
    %589 = vmatpush2.msra.mxu0 0.0
    %590 = vmatprep.subr.mxu0 0.0
    %591 = vmatpush2.msra.mxu0 0.0
    %592 = vmatprep.subr.mxu0 0.0
    %593 = vmatpush2.msra.mxu0 0.0
    %594 = vmatprep.subr.mxu0 0.0
    %595 = vmatpush2.msra.mxu0 0.0
    %596 = vmatprep.mubr.f32.mxu0 0.0
    %v597 = vand.u32 %v66, 4294901760
    %598 = vmatmul.mubr.f32.gmra.mxu0 %v597
    %v599 = vpop.f32.mrf.mxu0
    %v600 = vadd.f32 %v517, %v599
    %v601 = vpop.f32.mrf.mxu0
    %v602 = vadd.f32 %v519, %v601
    %603 = vmatprep.mubr.f32.mxu0 0.0
    %v604 = vand.u32 %v69, 4294901760
    %605 = vmatmul.mubr.f32.gmra.mxu0 %v604
    %v606 = vpop.f32.mrf.mxu0
    %v607 = vadd.f32 %v524, %v606
    %v608 = vpop.f32.mrf.mxu0
    %v609 = vadd.f32 %v526, %v608
    %610 = vdwg.mxu0
    %v612 = vsel %vm64, %v57, 0
    %v615 = vsel %vm64, %v58, 0
    %617 = vmatprep.subr.mxu0 0.0
    %618 = vmatpush1.msra.mxu0 0.0
    %619 = vmatprep.subr.mxu0 0.0
    %620 = vmatpush1.msra.mxu0 0.0
    %621 = vmatprep.subr.mxu0 0.0
    %622 = vmatpush1.msra.mxu0 0.0
    %623 = vmatprep.subr.mxu0 0.0
    %624 = vmatpush1.msra.mxu0 0.0
    %625 = vmatprep.subr.mxu0 0.0
    %626 = vmatpush1.msra.mxu0 0.0
    %627 = vmatprep.subr.mxu0 0.0
    %628 = vmatpush1.msra.mxu0 0.0
    %629 = vmatprep.subr.mxu0 0.0
    %630 = vmatpush1.msra.mxu0 0.0
    %631 = vmatprep.subr.mxu0 0.0
    %632 = vmatpush1.msra.mxu0 0.0
    %633 = vmatprep.subr.mxu0 0.0
    %634 = vmatpush1.msra.mxu0 0.0
    %635 = vmatprep.subr.mxu0 0.0
    %636 = vmatpush1.msra.mxu0 0.0
    %637 = vmatprep.subr.mxu0 0.0
    %638 = vmatpush1.msra.mxu0 0.0
    %639 = vmatprep.subr.mxu0 0.0
    %640 = vmatpush1.msra.mxu0 0.0
    %641 = vmatprep.subr.mxu0 0.0
    %642 = vmatpush1.msra.mxu0 0.0
    %643 = vmatprep.subr.mxu0 0.0
    %644 = vmatpush1.msra.mxu0 0.0
    %v645 = vand.u32 %v63, 4294901760
    %646 = vmatprep.subr.mxu0 %v645
    %v647 = vand.u32 %v62, 4294901760
    %648 = vmatpush1.msra.mxu0 %v647
    %v649 = vand.u32 %v61, 4294901760
    %650 = vmatprep.subr.mxu0 %v649
    %v651 = vand.u32 %v60, 4294901760
    %652 = vmatpush1.msra.mxu0 %v651
    %653 = vmatprep.subr.mxu0 0.0
    %654 = vmatpush2.msra.mxu0 0.0
    %655 = vmatprep.subr.mxu0 0.0
    %656 = vmatpush2.msra.mxu0 0.0
    %657 = vmatprep.subr.mxu0 0.0
    %658 = vmatpush2.msra.mxu0 0.0
    %659 = vmatprep.subr.mxu0 0.0
    %660 = vmatpush2.msra.mxu0 0.0
    %661 = vmatprep.subr.mxu0 0.0
    %662 = vmatpush2.msra.mxu0 0.0
    %663 = vmatprep.subr.mxu0 0.0
    %664 = vmatpush2.msra.mxu0 0.0
    %665 = vmatprep.subr.mxu0 0.0
    %666 = vmatpush2.msra.mxu0 0.0
    %667 = vmatprep.subr.mxu0 0.0
    %668 = vmatpush2.msra.mxu0 0.0
    %669 = vmatprep.subr.mxu0 0.0
    %670 = vmatpush2.msra.mxu0 0.0
    %671 = vmatprep.subr.mxu0 0.0
    %672 = vmatpush2.msra.mxu0 0.0
    %673 = vmatprep.subr.mxu0 0.0
    %674 = vmatpush2.msra.mxu0 0.0
    %675 = vmatprep.subr.mxu0 0.0
    %676 = vmatpush2.msra.mxu0 0.0
    %677 = vmatprep.subr.mxu0 0.0
    %678 = vmatpush2.msra.mxu0 0.0
    %679 = vmatprep.subr.mxu0 0.0
    %680 = vmatpush2.msra.mxu0 0.0
    %681 = vmatprep.subr.mxu0 0.0
    %682 = vmatpush2.msra.mxu0 0.0
    %683 = vmatprep.subr.mxu0 0.0
    %684 = vmatpush2.msra.mxu0 0.0
    %685 = vmatprep.mubr.f32.mxu0 0.0
    %v686 = vand.u32 %v612, 4294901760
    %v687 = vsub.f32 %v612, %v686
    %v688 = vand.u32 %v687, 4294901760
    %v689 = vsub.f32 %v687, %v688
    %v690 = vand.u32 %v689, 4294901760
    %691 = vmatmul.mubr.f32.gmra.mxu0 %v690
    %v692 = vpop.f32.mrf.mxu0
    %v693 = vadd.f32 0.0, %v692
    %v694 = vpop.f32.mrf.mxu0
    %v695 = vadd.f32 0.0, %v694
    %696 = vmatprep.mubr.f32.mxu0 0.0
    %v697 = vand.u32 %v615, 4294901760
    %v698 = vsub.f32 %v615, %v697
    %v699 = vand.u32 %v698, 4294901760
    %v700 = vsub.f32 %v698, %v699
    %v701 = vand.u32 %v700, 4294901760
    %702 = vmatmul.mubr.f32.gmra.mxu0 %v701
    %v703 = vpop.f32.mrf.mxu0
    %v704 = vadd.f32 0.0, %v703
    %v705 = vpop.f32.mrf.mxu0
    %v706 = vadd.f32 0.0, %v705
    %707 = vdwg.mxu0
    %708 = vmatprep.subr.mxu0 0.0
    %709 = vmatpush1.msra.mxu0 0.0
    %710 = vmatprep.subr.mxu0 0.0
    %711 = vmatpush1.msra.mxu0 0.0
    %712 = vmatprep.subr.mxu0 0.0
    %713 = vmatpush1.msra.mxu0 0.0
    %714 = vmatprep.subr.mxu0 0.0
    %715 = vmatpush1.msra.mxu0 0.0
    %716 = vmatprep.subr.mxu0 0.0
    %717 = vmatpush1.msra.mxu0 0.0
    %718 = vmatprep.subr.mxu0 0.0
    %719 = vmatpush1.msra.mxu0 0.0
    %720 = vmatprep.subr.mxu0 0.0
    %721 = vmatpush1.msra.mxu0 0.0
    %722 = vmatprep.subr.mxu0 0.0
    %723 = vmatpush1.msra.mxu0 0.0
    %724 = vmatprep.subr.mxu0 0.0
    %725 = vmatpush1.msra.mxu0 0.0
    %726 = vmatprep.subr.mxu0 0.0
    %727 = vmatpush1.msra.mxu0 0.0
    %728 = vmatprep.subr.mxu0 0.0
    %729 = vmatpush1.msra.mxu0 0.0
    %730 = vmatprep.subr.mxu0 0.0
    %731 = vmatpush1.msra.mxu0 0.0
    %732 = vmatprep.subr.mxu0 0.0
    %733 = vmatpush1.msra.mxu0 0.0
    %734 = vmatprep.subr.mxu0 0.0
    %735 = vmatpush1.msra.mxu0 0.0
    %v736 = vand.u32 %v63, 4294901760
    %v737 = vsub.f32 %v63, %v736
    %v738 = vand.u32 %v737, 4294901760
    %v739 = vsub.f32 %v737, %v738
    %v740 = vand.u32 %v739, 4294901760
    %741 = vmatprep.subr.mxu0 %v740
    %v742 = vand.u32 %v62, 4294901760
    %v743 = vsub.f32 %v62, %v742
    %v744 = vand.u32 %v743, 4294901760
    %v745 = vsub.f32 %v743, %v744
    %v746 = vand.u32 %v745, 4294901760
    %747 = vmatpush1.msra.mxu0 %v746
    %v748 = vand.u32 %v61, 4294901760
    %v749 = vsub.f32 %v61, %v748
    %v750 = vand.u32 %v749, 4294901760
    %v751 = vsub.f32 %v749, %v750
    %v752 = vand.u32 %v751, 4294901760
    %753 = vmatprep.subr.mxu0 %v752
    %v754 = vand.u32 %v60, 4294901760
    %v755 = vsub.f32 %v60, %v754
    %v756 = vand.u32 %v755, 4294901760
    %v757 = vsub.f32 %v755, %v756
    %v758 = vand.u32 %v757, 4294901760
    %759 = vmatpush1.msra.mxu0 %v758
    %760 = vmatprep.subr.mxu0 0.0
    %761 = vmatpush2.msra.mxu0 0.0
    %762 = vmatprep.subr.mxu0 0.0
    %763 = vmatpush2.msra.mxu0 0.0
    %764 = vmatprep.subr.mxu0 0.0
    %765 = vmatpush2.msra.mxu0 0.0
    %766 = vmatprep.subr.mxu0 0.0
    %767 = vmatpush2.msra.mxu0 0.0
    %768 = vmatprep.subr.mxu0 0.0
    %769 = vmatpush2.msra.mxu0 0.0
    %770 = vmatprep.subr.mxu0 0.0
    %771 = vmatpush2.msra.mxu0 0.0
    %772 = vmatprep.subr.mxu0 0.0
    %773 = vmatpush2.msra.mxu0 0.0
    %774 = vmatprep.subr.mxu0 0.0
    %775 = vmatpush2.msra.mxu0 0.0
    %776 = vmatprep.subr.mxu0 0.0
    %777 = vmatpush2.msra.mxu0 0.0
    %778 = vmatprep.subr.mxu0 0.0
    %779 = vmatpush2.msra.mxu0 0.0
    %780 = vmatprep.subr.mxu0 0.0
    %781 = vmatpush2.msra.mxu0 0.0
    %782 = vmatprep.subr.mxu0 0.0
    %783 = vmatpush2.msra.mxu0 0.0
    %784 = vmatprep.subr.mxu0 0.0
    %785 = vmatpush2.msra.mxu0 0.0
    %786 = vmatprep.subr.mxu0 0.0
    %787 = vmatpush2.msra.mxu0 0.0
    %788 = vmatprep.subr.mxu0 0.0
    %789 = vmatpush2.msra.mxu0 0.0
    %790 = vmatprep.subr.mxu0 0.0
    %791 = vmatpush2.msra.mxu0 0.0
    %792 = vmatprep.mubr.f32.mxu0 0.0
    %v793 = vand.u32 %v612, 4294901760
    %794 = vmatmul.mubr.f32.gmra.mxu0 %v793
    %v795 = vpop.f32.mrf.mxu0
    %v796 = vadd.f32 %v693, %v795
    %v797 = vpop.f32.mrf.mxu0
    %v798 = vadd.f32 %v695, %v797
    %799 = vmatprep.mubr.f32.mxu0 0.0
    %v800 = vand.u32 %v615, 4294901760
    %801 = vmatmul.mubr.f32.gmra.mxu0 %v800
    %v802 = vpop.f32.mrf.mxu0
    %v803 = vadd.f32 %v704, %v802
    %v804 = vpop.f32.mrf.mxu0
    %v805 = vadd.f32 %v706, %v804
    %806 = vdwg.mxu0
    %807 = vmatprep.subr.mxu0 0.0
    %808 = vmatpush1.msra.mxu0 0.0
    %809 = vmatprep.subr.mxu0 0.0
    %810 = vmatpush1.msra.mxu0 0.0
    %811 = vmatprep.subr.mxu0 0.0
    %812 = vmatpush1.msra.mxu0 0.0
    %813 = vmatprep.subr.mxu0 0.0
    %814 = vmatpush1.msra.mxu0 0.0
    %815 = vmatprep.subr.mxu0 0.0
    %816 = vmatpush1.msra.mxu0 0.0
    %817 = vmatprep.subr.mxu0 0.0
    %818 = vmatpush1.msra.mxu0 0.0
    %819 = vmatprep.subr.mxu0 0.0
    %820 = vmatpush1.msra.mxu0 0.0
    %821 = vmatprep.subr.mxu0 0.0
    %822 = vmatpush1.msra.mxu0 0.0
    %823 = vmatprep.subr.mxu0 0.0
    %824 = vmatpush1.msra.mxu0 0.0
    %825 = vmatprep.subr.mxu0 0.0
    %826 = vmatpush1.msra.mxu0 0.0
    %827 = vmatprep.subr.mxu0 0.0
    %828 = vmatpush1.msra.mxu0 0.0
    %829 = vmatprep.subr.mxu0 0.0
    %830 = vmatpush1.msra.mxu0 0.0
    %831 = vmatprep.subr.mxu0 0.0
    %832 = vmatpush1.msra.mxu0 0.0
    %833 = vmatprep.subr.mxu0 0.0
    %834 = vmatpush1.msra.mxu0 0.0
    %v835 = vand.u32 %v63, 4294901760
    %v836 = vsub.f32 %v63, %v835
    %837 = vmatprep.subr.mxu0 %v836
    %v838 = vand.u32 %v62, 4294901760
    %v839 = vsub.f32 %v62, %v838
    %840 = vmatpush1.msra.mxu0 %v839
    %v841 = vand.u32 %v61, 4294901760
    %v842 = vsub.f32 %v61, %v841
    %843 = vmatprep.subr.mxu0 %v842
    %v844 = vand.u32 %v60, 4294901760
    %v845 = vsub.f32 %v60, %v844
    %846 = vmatpush1.msra.mxu0 %v845
    %847 = vmatprep.subr.mxu0 0.0
    %848 = vmatpush2.msra.mxu0 0.0
    %849 = vmatprep.subr.mxu0 0.0
    %850 = vmatpush2.msra.mxu0 0.0
    %851 = vmatprep.subr.mxu0 0.0
    %852 = vmatpush2.msra.mxu0 0.0
    %853 = vmatprep.subr.mxu0 0.0
    %854 = vmatpush2.msra.mxu0 0.0
    %855 = vmatprep.subr.mxu0 0.0
    %856 = vmatpush2.msra.mxu0 0.0
    %857 = vmatprep.subr.mxu0 0.0
    %858 = vmatpush2.msra.mxu0 0.0
    %859 = vmatprep.subr.mxu0 0.0
    %860 = vmatpush2.msra.mxu0 0.0
    %861 = vmatprep.subr.mxu0 0.0
    %862 = vmatpush2.msra.mxu0 0.0
    %863 = vmatprep.subr.mxu0 0.0
    %864 = vmatpush2.msra.mxu0 0.0
    %865 = vmatprep.subr.mxu0 0.0
    %866 = vmatpush2.msra.mxu0 0.0
    %867 = vmatprep.subr.mxu0 0.0
    %868 = vmatpush2.msra.mxu0 0.0
    %869 = vmatprep.subr.mxu0 0.0
    %870 = vmatpush2.msra.mxu0 0.0
    %871 = vmatprep.subr.mxu0 0.0
    %872 = vmatpush2.msra.mxu0 0.0
    %873 = vmatprep.subr.mxu0 0.0
    %874 = vmatpush2.msra.mxu0 0.0
    %875 = vmatprep.subr.mxu0 0.0
    %876 = vmatpush2.msra.mxu0 0.0
    %877 = vmatprep.subr.mxu0 0.0
    %878 = vmatpush2.msra.mxu0 0.0
    %879 = vmatprep.mubr.f32.mxu0 0.0
    %v880 = vand.u32 %v612, 4294901760
    %v881 = vsub.f32 %v612, %v880
    %882 = vmatmul.mubr.f32.gmra.mxu0 %v881
    %v883 = vpop.f32.mrf.mxu0
    %v884 = vadd.f32 %v796, %v883
    %v885 = vpop.f32.mrf.mxu0
    %v886 = vadd.f32 %v798, %v885
    %887 = vmatprep.mubr.f32.mxu0 0.0
    %v888 = vand.u32 %v615, 4294901760
    %v889 = vsub.f32 %v615, %v888
    %890 = vmatmul.mubr.f32.gmra.mxu0 %v889
    %v891 = vpop.f32.mrf.mxu0
    %v892 = vadd.f32 %v803, %v891
    %v893 = vpop.f32.mrf.mxu0
    %v894 = vadd.f32 %v805, %v893
    %895 = vdwg.mxu0
    %896 = vmatprep.subr.mxu0 0.0
    %897 = vmatpush1.msra.mxu0 0.0
    %898 = vmatprep.subr.mxu0 0.0
    %899 = vmatpush1.msra.mxu0 0.0
    %900 = vmatprep.subr.mxu0 0.0
    %901 = vmatpush1.msra.mxu0 0.0
    %902 = vmatprep.subr.mxu0 0.0
    %903 = vmatpush1.msra.mxu0 0.0
    %904 = vmatprep.subr.mxu0 0.0
    %905 = vmatpush1.msra.mxu0 0.0
    %906 = vmatprep.subr.mxu0 0.0
    %907 = vmatpush1.msra.mxu0 0.0
    %908 = vmatprep.subr.mxu0 0.0
    %909 = vmatpush1.msra.mxu0 0.0
    %910 = vmatprep.subr.mxu0 0.0
    %911 = vmatpush1.msra.mxu0 0.0
    %912 = vmatprep.subr.mxu0 0.0
    %913 = vmatpush1.msra.mxu0 0.0
    %914 = vmatprep.subr.mxu0 0.0
    %915 = vmatpush1.msra.mxu0 0.0
    %916 = vmatprep.subr.mxu0 0.0
    %917 = vmatpush1.msra.mxu0 0.0
    %918 = vmatprep.subr.mxu0 0.0
    %919 = vmatpush1.msra.mxu0 0.0
    %920 = vmatprep.subr.mxu0 0.0
    %921 = vmatpush1.msra.mxu0 0.0
    %922 = vmatprep.subr.mxu0 0.0
    %923 = vmatpush1.msra.mxu0 0.0
    %v924 = vand.u32 %v63, 4294901760
    %925 = vmatprep.subr.mxu0 %v924
    %v926 = vand.u32 %v62, 4294901760
    %927 = vmatpush1.msra.mxu0 %v926
    %v928 = vand.u32 %v61, 4294901760
    %929 = vmatprep.subr.mxu0 %v928
    %v930 = vand.u32 %v60, 4294901760
    %931 = vmatpush1.msra.mxu0 %v930
    %932 = vmatprep.subr.mxu0 0.0
    %933 = vmatpush2.msra.mxu0 0.0
    %934 = vmatprep.subr.mxu0 0.0
    %935 = vmatpush2.msra.mxu0 0.0
    %936 = vmatprep.subr.mxu0 0.0
    %937 = vmatpush2.msra.mxu0 0.0
    %938 = vmatprep.subr.mxu0 0.0
    %939 = vmatpush2.msra.mxu0 0.0
    %940 = vmatprep.subr.mxu0 0.0
    %941 = vmatpush2.msra.mxu0 0.0
    %942 = vmatprep.subr.mxu0 0.0
    %943 = vmatpush2.msra.mxu0 0.0
    %944 = vmatprep.subr.mxu0 0.0
    %945 = vmatpush2.msra.mxu0 0.0
    %946 = vmatprep.subr.mxu0 0.0
    %947 = vmatpush2.msra.mxu0 0.0
    %948 = vmatprep.subr.mxu0 0.0
    %949 = vmatpush2.msra.mxu0 0.0
    %950 = vmatprep.subr.mxu0 0.0
    %951 = vmatpush2.msra.mxu0 0.0
    %952 = vmatprep.subr.mxu0 0.0
    %953 = vmatpush2.msra.mxu0 0.0
    %954 = vmatprep.subr.mxu0 0.0
    %955 = vmatpush2.msra.mxu0 0.0
    %956 = vmatprep.subr.mxu0 0.0
    %957 = vmatpush2.msra.mxu0 0.0
    %958 = vmatprep.subr.mxu0 0.0
    %959 = vmatpush2.msra.mxu0 0.0
    %960 = vmatprep.subr.mxu0 0.0
    %961 = vmatpush2.msra.mxu0 0.0
    %962 = vmatprep.subr.mxu0 0.0
    %963 = vmatpush2.msra.mxu0 0.0
    %964 = vmatprep.mubr.f32.mxu0 0.0
    %v965 = vand.u32 %v612, 4294901760
    %v966 = vsub.f32 %v612, %v965
    %v967 = vand.u32 %v966, 4294901760
    %968 = vmatmul.mubr.f32.gmra.mxu0 %v967
    %v969 = vpop.f32.mrf.mxu0
    %v970 = vadd.f32 %v884, %v969
    %v971 = vpop.f32.mrf.mxu0
    %v972 = vadd.f32 %v886, %v971
    %973 = vmatprep.mubr.f32.mxu0 0.0
    %v974 = vand.u32 %v615, 4294901760
    %v975 = vsub.f32 %v615, %v974
    %v976 = vand.u32 %v975, 4294901760
    %977 = vmatmul.mubr.f32.gmra.mxu0 %v976
    %v978 = vpop.f32.mrf.mxu0
    %v979 = vadd.f32 %v892, %v978
    %v980 = vpop.f32.mrf.mxu0
    %v981 = vadd.f32 %v894, %v980
    %982 = vdwg.mxu0
    %983 = vmatprep.subr.mxu0 0.0
    %984 = vmatpush1.msra.mxu0 0.0
    %985 = vmatprep.subr.mxu0 0.0
    %986 = vmatpush1.msra.mxu0 0.0
    %987 = vmatprep.subr.mxu0 0.0
    %988 = vmatpush1.msra.mxu0 0.0
    %989 = vmatprep.subr.mxu0 0.0
    %990 = vmatpush1.msra.mxu0 0.0
    %991 = vmatprep.subr.mxu0 0.0
    %992 = vmatpush1.msra.mxu0 0.0
    %993 = vmatprep.subr.mxu0 0.0
    %994 = vmatpush1.msra.mxu0 0.0
    %995 = vmatprep.subr.mxu0 0.0
    %996 = vmatpush1.msra.mxu0 0.0
    %997 = vmatprep.subr.mxu0 0.0
    %998 = vmatpush1.msra.mxu0 0.0
    %999 = vmatprep.subr.mxu0 0.0
    %1000 = vmatpush1.msra.mxu0 0.0
    %1001 = vmatprep.subr.mxu0 0.0
    %1002 = vmatpush1.msra.mxu0 0.0
    %1003 = vmatprep.subr.mxu0 0.0
    %1004 = vmatpush1.msra.mxu0 0.0
    %1005 = vmatprep.subr.mxu0 0.0
    %1006 = vmatpush1.msra.mxu0 0.0
    %1007 = vmatprep.subr.mxu0 0.0
    %1008 = vmatpush1.msra.mxu0 0.0
    %1009 = vmatprep.subr.mxu0 0.0
    %1010 = vmatpush1.msra.mxu0 0.0
    %v1011 = vand.u32 %v63, 4294901760
    %v1012 = vsub.f32 %v63, %v1011
    %v1013 = vand.u32 %v1012, 4294901760
    %1014 = vmatprep.subr.mxu0 %v1013
    %v1015 = vand.u32 %v62, 4294901760
    %v1016 = vsub.f32 %v62, %v1015
    %v1017 = vand.u32 %v1016, 4294901760
    %1018 = vmatpush1.msra.mxu0 %v1017
    %v1019 = vand.u32 %v61, 4294901760
    %v1020 = vsub.f32 %v61, %v1019
    %v1021 = vand.u32 %v1020, 4294901760
    %1022 = vmatprep.subr.mxu0 %v1021
    %v1023 = vand.u32 %v60, 4294901760
    %v1024 = vsub.f32 %v60, %v1023
    %v1025 = vand.u32 %v1024, 4294901760
    %1026 = vmatpush1.msra.mxu0 %v1025
    %1027 = vmatprep.subr.mxu0 0.0
    %1028 = vmatpush2.msra.mxu0 0.0
    %1029 = vmatprep.subr.mxu0 0.0
    %1030 = vmatpush2.msra.mxu0 0.0
    %1031 = vmatprep.subr.mxu0 0.0
    %1032 = vmatpush2.msra.mxu0 0.0
    %1033 = vmatprep.subr.mxu0 0.0
    %1034 = vmatpush2.msra.mxu0 0.0
    %1035 = vmatprep.subr.mxu0 0.0
    %1036 = vmatpush2.msra.mxu0 0.0
    %1037 = vmatprep.subr.mxu0 0.0
    %1038 = vmatpush2.msra.mxu0 0.0
    %1039 = vmatprep.subr.mxu0 0.0
    %1040 = vmatpush2.msra.mxu0 0.0
    %1041 = vmatprep.subr.mxu0 0.0
    %1042 = vmatpush2.msra.mxu0 0.0
    %1043 = vmatprep.subr.mxu0 0.0
    %1044 = vmatpush2.msra.mxu0 0.0
    %1045 = vmatprep.subr.mxu0 0.0
    %1046 = vmatpush2.msra.mxu0 0.0
    %1047 = vmatprep.subr.mxu0 0.0
    %1048 = vmatpush2.msra.mxu0 0.0
    %1049 = vmatprep.subr.mxu0 0.0
    %1050 = vmatpush2.msra.mxu0 0.0
    %1051 = vmatprep.subr.mxu0 0.0
    %1052 = vmatpush2.msra.mxu0 0.0
    %1053 = vmatprep.subr.mxu0 0.0
    %1054 = vmatpush2.msra.mxu0 0.0
    %1055 = vmatprep.subr.mxu0 0.0
    %1056 = vmatpush2.msra.mxu0 0.0
    %1057 = vmatprep.subr.mxu0 0.0
    %1058 = vmatpush2.msra.mxu0 0.0
    %1059 = vmatprep.mubr.f32.mxu0 0.0
    %v1060 = vand.u32 %v612, 4294901760
    %1061 = vmatmul.mubr.f32.gmra.mxu0 %v1060
    %v1062 = vpop.f32.mrf.mxu0
    %v1063 = vadd.f32 %v970, %v1062
    %v1064 = vpop.f32.mrf.mxu0
    %v1065 = vadd.f32 %v972, %v1064
    %1066 = vmatprep.mubr.f32.mxu0 0.0
    %v1067 = vand.u32 %v615, 4294901760
    %1068 = vmatmul.mubr.f32.gmra.mxu0 %v1067
    %v1069 = vpop.f32.mrf.mxu0
    %v1070 = vadd.f32 %v979, %v1069
    %v1071 = vpop.f32.mrf.mxu0
    %v1072 = vadd.f32 %v981, %v1071
    %1073 = vdwg.mxu0
    %1074 = vmatprep.subr.mxu0 0.0
    %1075 = vmatpush1.msra.mxu0 0.0
    %1076 = vmatprep.subr.mxu0 0.0
    %1077 = vmatpush1.msra.mxu0 0.0
    %1078 = vmatprep.subr.mxu0 0.0
    %1079 = vmatpush1.msra.mxu0 0.0
    %1080 = vmatprep.subr.mxu0 0.0
    %1081 = vmatpush1.msra.mxu0 0.0
    %1082 = vmatprep.subr.mxu0 0.0
    %1083 = vmatpush1.msra.mxu0 0.0
    %1084 = vmatprep.subr.mxu0 0.0
    %1085 = vmatpush1.msra.mxu0 0.0
    %1086 = vmatprep.subr.mxu0 0.0
    %1087 = vmatpush1.msra.mxu0 0.0
    %1088 = vmatprep.subr.mxu0 0.0
    %1089 = vmatpush1.msra.mxu0 0.0
    %1090 = vmatprep.subr.mxu0 0.0
    %1091 = vmatpush1.msra.mxu0 0.0
    %1092 = vmatprep.subr.mxu0 0.0
    %1093 = vmatpush1.msra.mxu0 0.0
    %1094 = vmatprep.subr.mxu0 0.0
    %1095 = vmatpush1.msra.mxu0 0.0
    %1096 = vmatprep.subr.mxu0 0.0
    %1097 = vmatpush1.msra.mxu0 0.0
    %1098 = vmatprep.subr.mxu0 0.0
    %1099 = vmatpush1.msra.mxu0 0.0
    %1100 = vmatprep.subr.mxu0 0.0
    %1101 = vmatpush1.msra.mxu0 0.0
    %v1102 = vand.u32 %v63, 4294901760
    %1103 = vmatprep.subr.mxu0 %v1102
    %v1104 = vand.u32 %v62, 4294901760
    %1105 = vmatpush1.msra.mxu0 %v1104
    %v1106 = vand.u32 %v61, 4294901760
    %1107 = vmatprep.subr.mxu0 %v1106
    %v1108 = vand.u32 %v60, 4294901760
    %1109 = vmatpush1.msra.mxu0 %v1108
    %1110 = vmatprep.subr.mxu0 0.0
    %1111 = vmatpush2.msra.mxu0 0.0
    %1112 = vmatprep.subr.mxu0 0.0
    %1113 = vmatpush2.msra.mxu0 0.0
    %1114 = vmatprep.subr.mxu0 0.0
    %1115 = vmatpush2.msra.mxu0 0.0
    %1116 = vmatprep.subr.mxu0 0.0
    %1117 = vmatpush2.msra.mxu0 0.0
    %1118 = vmatprep.subr.mxu0 0.0
    %1119 = vmatpush2.msra.mxu0 0.0
    %1120 = vmatprep.subr.mxu0 0.0
    %1121 = vmatpush2.msra.mxu0 0.0
    %1122 = vmatprep.subr.mxu0 0.0
    %1123 = vmatpush2.msra.mxu0 0.0
    %1124 = vmatprep.subr.mxu0 0.0
    %1125 = vmatpush2.msra.mxu0 0.0
    %1126 = vmatprep.subr.mxu0 0.0
    %1127 = vmatpush2.msra.mxu0 0.0
    %1128 = vmatprep.subr.mxu0 0.0
    %1129 = vmatpush2.msra.mxu0 0.0
    %1130 = vmatprep.subr.mxu0 0.0
    %1131 = vmatpush2.msra.mxu0 0.0
    %1132 = vmatprep.subr.mxu0 0.0
    %1133 = vmatpush2.msra.mxu0 0.0
    %1134 = vmatprep.subr.mxu0 0.0
    %1135 = vmatpush2.msra.mxu0 0.0
    %1136 = vmatprep.subr.mxu0 0.0
    %1137 = vmatpush2.msra.mxu0 0.0
    %1138 = vmatprep.subr.mxu0 0.0
    %1139 = vmatpush2.msra.mxu0 0.0
    %1140 = vmatprep.subr.mxu0 0.0
    %1141 = vmatpush2.msra.mxu0 0.0
    %1142 = vmatprep.mubr.f32.mxu0 0.0
    %v1143 = vand.u32 %v612, 4294901760
    %1144 = vmatmul.mubr.f32.gmra.mxu0 %v1143
    %v1145 = vpop.f32.mrf.mxu0
    %v1146 = vadd.f32 %v1063, %v1145
    %v1147 = vpop.f32.mrf.mxu0
    %v1148 = vadd.f32 %v1065, %v1147
    %1149 = vmatprep.mubr.f32.mxu0 0.0
    %v1150 = vand.u32 %v615, 4294901760
    %1151 = vmatmul.mubr.f32.gmra.mxu0 %v1150
    %v1152 = vpop.f32.mrf.mxu0
    %v1153 = vadd.f32 %v1070, %v1152
    %v1154 = vpop.f32.mrf.mxu0
    %v1155 = vadd.f32 %v1072, %v1154
    %1156 = vdwg.mxu0
    %vm1157 = vcmp.eq.s32.totalorder %v59, 0
    %vm1158 = vcmp.eq.s32.totalorder %v59, 1
    %v1159 = vsel %vm1158, 1, 0
    %v1160 = vlaneseq
    %v1161 = vshrl.u32 %v1160, 7
    %v1162 = vsub.s32 0, %v1161
    %v1163 = vrot.slane %v1159, %v1162
    %v1164 = vlaneseq
    %v1165 = vshrl.u32 %v1164, 7
    %v1166 = vsub.s32 2, %v1165
    %v1167 = vrot.slane %v1159, %v1166
    %v1168 = vlaneseq
    %v1169 = vshrl.u32 %v1168, 7
    %v1170 = vsub.s32 0, %v1169
    %v1171 = vrot.slane %v1163, %v1170
    %v1172 = vlaneseq
    %v1173 = vshrl.u32 %v1172, 7
    %v1174 = vsub.s32 0, %v1173
    %v1175 = vrot.slane %v1167, %v1174
    %vm1176 = vcmp.eq.s32.totalorder %v1171, 1
    %vm1177 = vcmp.eq.s32.totalorder %v1175, 1
    %v1178 = vsel %vm1176, %v1146, %v60
    %v1179 = vsel %vm1177, %v1148, %v61
    %v1180 = vsel %vm1176, %v1153, %v62
    %v1181 = vsel %vm1177, %v1155, %v63
    %v1182 = vsel %vm1157, 1, 0
    %v1183 = vlaneseq
    %v1184 = vshrl.u32 %v1183, 7
    %v1185 = vsub.s32 0, %v1184
    %v1186 = vrot.slane %v1182, %v1185
    %v1187 = vlaneseq
    %v1188 = vshrl.u32 %v1187, 7
    %v1189 = vsub.s32 2, %v1188
    %v1190 = vrot.slane %v1182, %v1189
    %v1191 = vlaneseq
    %v1192 = vshrl.u32 %v1191, 7
    %v1193 = vsub.s32 0, %v1192
    %v1194 = vrot.slane %v1186, %v1193
    %v1195 = vlaneseq
    %v1196 = vshrl.u32 %v1195, 7
    %v1197 = vsub.s32 0, %v1196
    %v1198 = vrot.slane %v1190, %v1197
    %vm1199 = vcmp.eq.s32.totalorder %v1194, 1
    %vm1200 = vcmp.eq.s32.totalorder %v1198, 1
    %v1201 = vsel %vm1199, %v600, %v1178
    %v1202 = vsel %vm1200, %v602, %v1179
    %v1203 = vsel %vm1199, %v607, %v1180
    %v1204 = vsel %vm1200, %v609, %v1181
    %1205 = vmatprep.subr.mxu0 0.0
    %1206 = vmatpush1.msra.mxu0 0.0
    %1207 = vmatprep.subr.mxu0 0.0
    %1208 = vmatpush1.msra.mxu0 0.0
    %1209 = vmatprep.subr.mxu0 0.0
    %1210 = vmatpush1.msra.mxu0 0.0
    %1211 = vmatprep.subr.mxu0 0.0
    %1212 = vmatpush1.msra.mxu0 0.0
    %1213 = vmatprep.subr.mxu0 0.0
    %1214 = vmatpush1.msra.mxu0 0.0
    %1215 = vmatprep.subr.mxu0 0.0
    %1216 = vmatpush1.msra.mxu0 0.0
    %1217 = vmatprep.subr.mxu0 0.0
    %1218 = vmatpush1.msra.mxu0 0.0
    %1219 = vmatprep.subr.mxu0 0.0
    %1220 = vmatpush1.msra.mxu0 0.0
    %1221 = vmatprep.subr.mxu0 0.0
    %1222 = vmatpush1.msra.mxu0 0.0
    %1223 = vmatprep.subr.mxu0 0.0
    %1224 = vmatpush1.msra.mxu0 0.0
    %1225 = vmatprep.subr.mxu0 0.0
    %1226 = vmatpush1.msra.mxu0 0.0
    %1227 = vmatprep.subr.mxu0 0.0
    %1228 = vmatpush1.msra.mxu0 0.0
    %1229 = vmatprep.subr.mxu0 0.0
    %1230 = vmatpush1.msra.mxu0 0.0
    %1231 = vmatprep.subr.mxu0 0.0
    %1232 = vmatpush1.msra.mxu0 0.0
    %v1233 = vand.u32 %v1204, 4294901760
    %1234 = vmatprep.subr.mxu0 %v1233
    %v1235 = vand.u32 %v1203, 4294901760
    %1236 = vmatpush1.msra.mxu0 %v1235
    %v1237 = vand.u32 %v1202, 4294901760
    %1238 = vmatprep.subr.mxu0 %v1237
    %v1239 = vand.u32 %v1201, 4294901760
    %1240 = vmatpush1.msra.mxu0 %v1239
    %1241 = vmatprep.subr.mxu0 0.0
    %1242 = vmatpush2.msra.mxu0 0.0
    %1243 = vmatprep.subr.mxu0 0.0
    %1244 = vmatpush2.msra.mxu0 0.0
    %1245 = vmatprep.subr.mxu0 0.0
    %1246 = vmatpush2.msra.mxu0 0.0
    %1247 = vmatprep.subr.mxu0 0.0
    %1248 = vmatpush2.msra.mxu0 0.0
    %1249 = vmatprep.subr.mxu0 0.0
    %1250 = vmatpush2.msra.mxu0 0.0
    %1251 = vmatprep.subr.mxu0 0.0
    %1252 = vmatpush2.msra.mxu0 0.0
    %1253 = vmatprep.subr.mxu0 0.0
    %1254 = vmatpush2.msra.mxu0 0.0
    %1255 = vmatprep.subr.mxu0 0.0
    %1256 = vmatpush2.msra.mxu0 0.0
    %1257 = vmatprep.subr.mxu0 0.0
    %1258 = vmatpush2.msra.mxu0 0.0
    %1259 = vmatprep.subr.mxu0 0.0
    %1260 = vmatpush2.msra.mxu0 0.0
    %1261 = vmatprep.subr.mxu0 0.0
    %1262 = vmatpush2.msra.mxu0 0.0
    %1263 = vmatprep.subr.mxu0 0.0
    %1264 = vmatpush2.msra.mxu0 0.0
    %1265 = vmatprep.subr.mxu0 0.0
    %1266 = vmatpush2.msra.mxu0 0.0
    %1267 = vmatprep.subr.mxu0 0.0
    %1268 = vmatpush2.msra.mxu0 0.0
    %1269 = vmatprep.subr.mxu0 0.0
    %1270 = vmatpush2.msra.mxu0 0.0
    %1271 = vmatprep.subr.mxu0 0.0
    %1272 = vmatpush2.msra.mxu0 0.0
    %1273 = vmatprep.mubr.f32.mxu0 0.0
    %v1274 = vand.u32 %v66, 4294901760
    %v1275 = vsub.f32 %v66, %v1274
    %v1276 = vand.u32 %v1275, 4294901760
    %v1277 = vsub.f32 %v1275, %v1276
    %v1278 = vand.u32 %v1277, 4294901760
    %1279 = vmatmul.mubr.f32.gmra.mxu0 %v1278
    %v1280 = vpop.f32.mrf.mxu0
    %v1281 = vadd.f32 0.0, %v1280
    %v1282 = vpop.f32.mrf.mxu0
    %v1283 = vadd.f32 0.0, %v1282
    %1284 = vmatprep.mubr.f32.mxu0 0.0
    %v1285 = vand.u32 %v69, 4294901760
    %v1286 = vsub.f32 %v69, %v1285
    %v1287 = vand.u32 %v1286, 4294901760
    %v1288 = vsub.f32 %v1286, %v1287
    %v1289 = vand.u32 %v1288, 4294901760
    %1290 = vmatmul.mubr.f32.gmra.mxu0 %v1289
    %v1291 = vpop.f32.mrf.mxu0
    %v1292 = vadd.f32 0.0, %v1291
    %v1293 = vpop.f32.mrf.mxu0
    %v1294 = vadd.f32 0.0, %v1293
    %1295 = vdwg.mxu0
    %1296 = vmatprep.subr.mxu0 0.0
    %1297 = vmatpush1.msra.mxu0 0.0
    %1298 = vmatprep.subr.mxu0 0.0
    %1299 = vmatpush1.msra.mxu0 0.0
    %1300 = vmatprep.subr.mxu0 0.0
    %1301 = vmatpush1.msra.mxu0 0.0
    %1302 = vmatprep.subr.mxu0 0.0
    %1303 = vmatpush1.msra.mxu0 0.0
    %1304 = vmatprep.subr.mxu0 0.0
    %1305 = vmatpush1.msra.mxu0 0.0
    %1306 = vmatprep.subr.mxu0 0.0
    %1307 = vmatpush1.msra.mxu0 0.0
    %1308 = vmatprep.subr.mxu0 0.0
    %1309 = vmatpush1.msra.mxu0 0.0
    %1310 = vmatprep.subr.mxu0 0.0
    %1311 = vmatpush1.msra.mxu0 0.0
    %1312 = vmatprep.subr.mxu0 0.0
    %1313 = vmatpush1.msra.mxu0 0.0
    %1314 = vmatprep.subr.mxu0 0.0
    %1315 = vmatpush1.msra.mxu0 0.0
    %1316 = vmatprep.subr.mxu0 0.0
    %1317 = vmatpush1.msra.mxu0 0.0
    %1318 = vmatprep.subr.mxu0 0.0
    %1319 = vmatpush1.msra.mxu0 0.0
    %1320 = vmatprep.subr.mxu0 0.0
    %1321 = vmatpush1.msra.mxu0 0.0
    %1322 = vmatprep.subr.mxu0 0.0
    %1323 = vmatpush1.msra.mxu0 0.0
    %v1324 = vand.u32 %v1204, 4294901760
    %v1325 = vsub.f32 %v1204, %v1324
    %v1326 = vand.u32 %v1325, 4294901760
    %v1327 = vsub.f32 %v1325, %v1326
    %v1328 = vand.u32 %v1327, 4294901760
    %1329 = vmatprep.subr.mxu0 %v1328
    %v1330 = vand.u32 %v1203, 4294901760
    %v1331 = vsub.f32 %v1203, %v1330
    %v1332 = vand.u32 %v1331, 4294901760
    %v1333 = vsub.f32 %v1331, %v1332
    %v1334 = vand.u32 %v1333, 4294901760
    %1335 = vmatpush1.msra.mxu0 %v1334
    %v1336 = vand.u32 %v1202, 4294901760
    %v1337 = vsub.f32 %v1202, %v1336
    %v1338 = vand.u32 %v1337, 4294901760
    %v1339 = vsub.f32 %v1337, %v1338
    %v1340 = vand.u32 %v1339, 4294901760
    %1341 = vmatprep.subr.mxu0 %v1340
    %v1342 = vand.u32 %v1201, 4294901760
    %v1343 = vsub.f32 %v1201, %v1342
    %v1344 = vand.u32 %v1343, 4294901760
    %v1345 = vsub.f32 %v1343, %v1344
    %v1346 = vand.u32 %v1345, 4294901760
    %1347 = vmatpush1.msra.mxu0 %v1346
    %1348 = vmatprep.subr.mxu0 0.0
    %1349 = vmatpush2.msra.mxu0 0.0
    %1350 = vmatprep.subr.mxu0 0.0
    %1351 = vmatpush2.msra.mxu0 0.0
    %1352 = vmatprep.subr.mxu0 0.0
    %1353 = vmatpush2.msra.mxu0 0.0
    %1354 = vmatprep.subr.mxu0 0.0
    %1355 = vmatpush2.msra.mxu0 0.0
    %1356 = vmatprep.subr.mxu0 0.0
    %1357 = vmatpush2.msra.mxu0 0.0
    %1358 = vmatprep.subr.mxu0 0.0
    %1359 = vmatpush2.msra.mxu0 0.0
    %1360 = vmatprep.subr.mxu0 0.0
    %1361 = vmatpush2.msra.mxu0 0.0
    %1362 = vmatprep.subr.mxu0 0.0
    %1363 = vmatpush2.msra.mxu0 0.0
    %1364 = vmatprep.subr.mxu0 0.0
    %1365 = vmatpush2.msra.mxu0 0.0
    %1366 = vmatprep.subr.mxu0 0.0
    %1367 = vmatpush2.msra.mxu0 0.0
    %1368 = vmatprep.subr.mxu0 0.0
    %1369 = vmatpush2.msra.mxu0 0.0
    %1370 = vmatprep.subr.mxu0 0.0
    %1371 = vmatpush2.msra.mxu0 0.0
    %1372 = vmatprep.subr.mxu0 0.0
    %1373 = vmatpush2.msra.mxu0 0.0
    %1374 = vmatprep.subr.mxu0 0.0
    %1375 = vmatpush2.msra.mxu0 0.0
    %1376 = vmatprep.subr.mxu0 0.0
    %1377 = vmatpush2.msra.mxu0 0.0
    %1378 = vmatprep.subr.mxu0 0.0
    %1379 = vmatpush2.msra.mxu0 0.0
    %1380 = vmatprep.mubr.f32.mxu0 0.0
    %v1381 = vand.u32 %v66, 4294901760
    %1382 = vmatmul.mubr.f32.gmra.mxu0 %v1381
    %v1383 = vpop.f32.mrf.mxu0
    %v1384 = vadd.f32 %v1281, %v1383
    %v1385 = vpop.f32.mrf.mxu0
    %v1386 = vadd.f32 %v1283, %v1385
    %1387 = vmatprep.mubr.f32.mxu0 0.0
    %v1388 = vand.u32 %v69, 4294901760
    %1389 = vmatmul.mubr.f32.gmra.mxu0 %v1388
    %v1390 = vpop.f32.mrf.mxu0
    %v1391 = vadd.f32 %v1292, %v1390
    %v1392 = vpop.f32.mrf.mxu0
    %v1393 = vadd.f32 %v1294, %v1392
    %1394 = vdwg.mxu0
    %1395 = vmatprep.subr.mxu0 0.0
    %1396 = vmatpush1.msra.mxu0 0.0
    %1397 = vmatprep.subr.mxu0 0.0
    %1398 = vmatpush1.msra.mxu0 0.0
    %1399 = vmatprep.subr.mxu0 0.0
    %1400 = vmatpush1.msra.mxu0 0.0
    %1401 = vmatprep.subr.mxu0 0.0
    %1402 = vmatpush1.msra.mxu0 0.0
    %1403 = vmatprep.subr.mxu0 0.0
    %1404 = vmatpush1.msra.mxu0 0.0
    %1405 = vmatprep.subr.mxu0 0.0
    %1406 = vmatpush1.msra.mxu0 0.0
    %1407 = vmatprep.subr.mxu0 0.0
    %1408 = vmatpush1.msra.mxu0 0.0
    %1409 = vmatprep.subr.mxu0 0.0
    %1410 = vmatpush1.msra.mxu0 0.0
    %1411 = vmatprep.subr.mxu0 0.0
    %1412 = vmatpush1.msra.mxu0 0.0
    %1413 = vmatprep.subr.mxu0 0.0
    %1414 = vmatpush1.msra.mxu0 0.0
    %1415 = vmatprep.subr.mxu0 0.0
    %1416 = vmatpush1.msra.mxu0 0.0
    %1417 = vmatprep.subr.mxu0 0.0
    %1418 = vmatpush1.msra.mxu0 0.0
    %1419 = vmatprep.subr.mxu0 0.0
    %1420 = vmatpush1.msra.mxu0 0.0
    %1421 = vmatprep.subr.mxu0 0.0
    %1422 = vmatpush1.msra.mxu0 0.0
    %v1423 = vand.u32 %v1204, 4294901760
    %v1424 = vsub.f32 %v1204, %v1423
    %1425 = vmatprep.subr.mxu0 %v1424
    %v1426 = vand.u32 %v1203, 4294901760
    %v1427 = vsub.f32 %v1203, %v1426
    %1428 = vmatpush1.msra.mxu0 %v1427
    %v1429 = vand.u32 %v1202, 4294901760
    %v1430 = vsub.f32 %v1202, %v1429
    %1431 = vmatprep.subr.mxu0 %v1430
    %v1432 = vand.u32 %v1201, 4294901760
    %v1433 = vsub.f32 %v1201, %v1432
    %1434 = vmatpush1.msra.mxu0 %v1433
    %1435 = vmatprep.subr.mxu0 0.0
    %1436 = vmatpush2.msra.mxu0 0.0
    %1437 = vmatprep.subr.mxu0 0.0
    %1438 = vmatpush2.msra.mxu0 0.0
    %1439 = vmatprep.subr.mxu0 0.0
    %1440 = vmatpush2.msra.mxu0 0.0
    %1441 = vmatprep.subr.mxu0 0.0
    %1442 = vmatpush2.msra.mxu0 0.0
    %1443 = vmatprep.subr.mxu0 0.0
    %1444 = vmatpush2.msra.mxu0 0.0
    %1445 = vmatprep.subr.mxu0 0.0
    %1446 = vmatpush2.msra.mxu0 0.0
    %1447 = vmatprep.subr.mxu0 0.0
    %1448 = vmatpush2.msra.mxu0 0.0
    %1449 = vmatprep.subr.mxu0 0.0
    %1450 = vmatpush2.msra.mxu0 0.0
    %1451 = vmatprep.subr.mxu0 0.0
    %1452 = vmatpush2.msra.mxu0 0.0
    %1453 = vmatprep.subr.mxu0 0.0
    %1454 = vmatpush2.msra.mxu0 0.0
    %1455 = vmatprep.subr.mxu0 0.0
    %1456 = vmatpush2.msra.mxu0 0.0
    %1457 = vmatprep.subr.mxu0 0.0
    %1458 = vmatpush2.msra.mxu0 0.0
    %1459 = vmatprep.subr.mxu0 0.0
    %1460 = vmatpush2.msra.mxu0 0.0
    %1461 = vmatprep.subr.mxu0 0.0
    %1462 = vmatpush2.msra.mxu0 0.0
    %1463 = vmatprep.subr.mxu0 0.0
    %1464 = vmatpush2.msra.mxu0 0.0
    %1465 = vmatprep.subr.mxu0 0.0
    %1466 = vmatpush2.msra.mxu0 0.0
    %1467 = vmatprep.mubr.f32.mxu0 0.0
    %v1468 = vand.u32 %v66, 4294901760
    %v1469 = vsub.f32 %v66, %v1468
    %1470 = vmatmul.mubr.f32.gmra.mxu0 %v1469
    %v1471 = vpop.f32.mrf.mxu0
    %v1472 = vadd.f32 %v1384, %v1471
    %v1473 = vpop.f32.mrf.mxu0
    %v1474 = vadd.f32 %v1386, %v1473
    %1475 = vmatprep.mubr.f32.mxu0 0.0
    %v1476 = vand.u32 %v69, 4294901760
    %v1477 = vsub.f32 %v69, %v1476
    %1478 = vmatmul.mubr.f32.gmra.mxu0 %v1477
    %v1479 = vpop.f32.mrf.mxu0
    %v1480 = vadd.f32 %v1391, %v1479
    %v1481 = vpop.f32.mrf.mxu0
    %v1482 = vadd.f32 %v1393, %v1481
    %1483 = vdwg.mxu0
    %1484 = vmatprep.subr.mxu0 0.0
    %1485 = vmatpush1.msra.mxu0 0.0
    %1486 = vmatprep.subr.mxu0 0.0
    %1487 = vmatpush1.msra.mxu0 0.0
    %1488 = vmatprep.subr.mxu0 0.0
    %1489 = vmatpush1.msra.mxu0 0.0
    %1490 = vmatprep.subr.mxu0 0.0
    %1491 = vmatpush1.msra.mxu0 0.0
    %1492 = vmatprep.subr.mxu0 0.0
    %1493 = vmatpush1.msra.mxu0 0.0
    %1494 = vmatprep.subr.mxu0 0.0
    %1495 = vmatpush1.msra.mxu0 0.0
    %1496 = vmatprep.subr.mxu0 0.0
    %1497 = vmatpush1.msra.mxu0 0.0
    %1498 = vmatprep.subr.mxu0 0.0
    %1499 = vmatpush1.msra.mxu0 0.0
    %1500 = vmatprep.subr.mxu0 0.0
    %1501 = vmatpush1.msra.mxu0 0.0
    %1502 = vmatprep.subr.mxu0 0.0
    %1503 = vmatpush1.msra.mxu0 0.0
    %1504 = vmatprep.subr.mxu0 0.0
    %1505 = vmatpush1.msra.mxu0 0.0
    %1506 = vmatprep.subr.mxu0 0.0
    %1507 = vmatpush1.msra.mxu0 0.0
    %1508 = vmatprep.subr.mxu0 0.0
    %1509 = vmatpush1.msra.mxu0 0.0
    %1510 = vmatprep.subr.mxu0 0.0
    %1511 = vmatpush1.msra.mxu0 0.0
    %v1512 = vand.u32 %v1204, 4294901760
    %1513 = vmatprep.subr.mxu0 %v1512
    %v1514 = vand.u32 %v1203, 4294901760
    %1515 = vmatpush1.msra.mxu0 %v1514
    %v1516 = vand.u32 %v1202, 4294901760
    %1517 = vmatprep.subr.mxu0 %v1516
    %v1518 = vand.u32 %v1201, 4294901760
    %1519 = vmatpush1.msra.mxu0 %v1518
    %1520 = vmatprep.subr.mxu0 0.0
    %1521 = vmatpush2.msra.mxu0 0.0
    %1522 = vmatprep.subr.mxu0 0.0
    %1523 = vmatpush2.msra.mxu0 0.0
    %1524 = vmatprep.subr.mxu0 0.0
    %1525 = vmatpush2.msra.mxu0 0.0
    %1526 = vmatprep.subr.mxu0 0.0
    %1527 = vmatpush2.msra.mxu0 0.0
    %1528 = vmatprep.subr.mxu0 0.0
    %1529 = vmatpush2.msra.mxu0 0.0
    %1530 = vmatprep.subr.mxu0 0.0
    %1531 = vmatpush2.msra.mxu0 0.0
    %1532 = vmatprep.subr.mxu0 0.0
    %1533 = vmatpush2.msra.mxu0 0.0
    %1534 = vmatprep.subr.mxu0 0.0
    %1535 = vmatpush2.msra.mxu0 0.0
    %1536 = vmatprep.subr.mxu0 0.0
    %1537 = vmatpush2.msra.mxu0 0.0
    %1538 = vmatprep.subr.mxu0 0.0
    %1539 = vmatpush2.msra.mxu0 0.0
    %1540 = vmatprep.subr.mxu0 0.0
    %1541 = vmatpush2.msra.mxu0 0.0
    %1542 = vmatprep.subr.mxu0 0.0
    %1543 = vmatpush2.msra.mxu0 0.0
    %1544 = vmatprep.subr.mxu0 0.0
    %1545 = vmatpush2.msra.mxu0 0.0
    %1546 = vmatprep.subr.mxu0 0.0
    %1547 = vmatpush2.msra.mxu0 0.0
    %1548 = vmatprep.subr.mxu0 0.0
    %1549 = vmatpush2.msra.mxu0 0.0
    %1550 = vmatprep.subr.mxu0 0.0
    %1551 = vmatpush2.msra.mxu0 0.0
    %1552 = vmatprep.mubr.f32.mxu0 0.0
    %v1553 = vand.u32 %v66, 4294901760
    %v1554 = vsub.f32 %v66, %v1553
    %v1555 = vand.u32 %v1554, 4294901760
    %1556 = vmatmul.mubr.f32.gmra.mxu0 %v1555
    %v1557 = vpop.f32.mrf.mxu0
    %v1558 = vadd.f32 %v1472, %v1557
    %v1559 = vpop.f32.mrf.mxu0
    %v1560 = vadd.f32 %v1474, %v1559
    %1561 = vmatprep.mubr.f32.mxu0 0.0
    %v1562 = vand.u32 %v69, 4294901760
    %v1563 = vsub.f32 %v69, %v1562
    %v1564 = vand.u32 %v1563, 4294901760
    %1565 = vmatmul.mubr.f32.gmra.mxu0 %v1564
    %v1566 = vpop.f32.mrf.mxu0
    %v1567 = vadd.f32 %v1480, %v1566
    %v1568 = vpop.f32.mrf.mxu0
    %v1569 = vadd.f32 %v1482, %v1568
    %1570 = vdwg.mxu0
    %1571 = vmatprep.subr.mxu0 0.0
    %1572 = vmatpush1.msra.mxu0 0.0
    %1573 = vmatprep.subr.mxu0 0.0
    %1574 = vmatpush1.msra.mxu0 0.0
    %1575 = vmatprep.subr.mxu0 0.0
    %1576 = vmatpush1.msra.mxu0 0.0
    %1577 = vmatprep.subr.mxu0 0.0
    %1578 = vmatpush1.msra.mxu0 0.0
    %1579 = vmatprep.subr.mxu0 0.0
    %1580 = vmatpush1.msra.mxu0 0.0
    %1581 = vmatprep.subr.mxu0 0.0
    %1582 = vmatpush1.msra.mxu0 0.0
    %1583 = vmatprep.subr.mxu0 0.0
    %1584 = vmatpush1.msra.mxu0 0.0
    %1585 = vmatprep.subr.mxu0 0.0
    %1586 = vmatpush1.msra.mxu0 0.0
    %1587 = vmatprep.subr.mxu0 0.0
    %1588 = vmatpush1.msra.mxu0 0.0
    %1589 = vmatprep.subr.mxu0 0.0
    %1590 = vmatpush1.msra.mxu0 0.0
    %1591 = vmatprep.subr.mxu0 0.0
    %1592 = vmatpush1.msra.mxu0 0.0
    %1593 = vmatprep.subr.mxu0 0.0
    %1594 = vmatpush1.msra.mxu0 0.0
    %1595 = vmatprep.subr.mxu0 0.0
    %1596 = vmatpush1.msra.mxu0 0.0
    %1597 = vmatprep.subr.mxu0 0.0
    %1598 = vmatpush1.msra.mxu0 0.0
    %v1599 = vand.u32 %v1204, 4294901760
    %v1600 = vsub.f32 %v1204, %v1599
    %v1601 = vand.u32 %v1600, 4294901760
    %1602 = vmatprep.subr.mxu0 %v1601
    %v1603 = vand.u32 %v1203, 4294901760
    %v1604 = vsub.f32 %v1203, %v1603
    %v1605 = vand.u32 %v1604, 4294901760
    %1606 = vmatpush1.msra.mxu0 %v1605
    %v1607 = vand.u32 %v1202, 4294901760
    %v1608 = vsub.f32 %v1202, %v1607
    %v1609 = vand.u32 %v1608, 4294901760
    %1610 = vmatprep.subr.mxu0 %v1609
    %v1611 = vand.u32 %v1201, 4294901760
    %v1612 = vsub.f32 %v1201, %v1611
    %v1613 = vand.u32 %v1612, 4294901760
    %1614 = vmatpush1.msra.mxu0 %v1613
    %1615 = vmatprep.subr.mxu0 0.0
    %1616 = vmatpush2.msra.mxu0 0.0
    %1617 = vmatprep.subr.mxu0 0.0
    %1618 = vmatpush2.msra.mxu0 0.0
    %1619 = vmatprep.subr.mxu0 0.0
    %1620 = vmatpush2.msra.mxu0 0.0
    %1621 = vmatprep.subr.mxu0 0.0
    %1622 = vmatpush2.msra.mxu0 0.0
    %1623 = vmatprep.subr.mxu0 0.0
    %1624 = vmatpush2.msra.mxu0 0.0
    %1625 = vmatprep.subr.mxu0 0.0
    %1626 = vmatpush2.msra.mxu0 0.0
    %1627 = vmatprep.subr.mxu0 0.0
    %1628 = vmatpush2.msra.mxu0 0.0
    %1629 = vmatprep.subr.mxu0 0.0
    %1630 = vmatpush2.msra.mxu0 0.0
    %1631 = vmatprep.subr.mxu0 0.0
    %1632 = vmatpush2.msra.mxu0 0.0
    %1633 = vmatprep.subr.mxu0 0.0
    %1634 = vmatpush2.msra.mxu0 0.0
    %1635 = vmatprep.subr.mxu0 0.0
    %1636 = vmatpush2.msra.mxu0 0.0
    %1637 = vmatprep.subr.mxu0 0.0
    %1638 = vmatpush2.msra.mxu0 0.0
    %1639 = vmatprep.subr.mxu0 0.0
    %1640 = vmatpush2.msra.mxu0 0.0
    %1641 = vmatprep.subr.mxu0 0.0
    %1642 = vmatpush2.msra.mxu0 0.0
    %1643 = vmatprep.subr.mxu0 0.0
    %1644 = vmatpush2.msra.mxu0 0.0
    %1645 = vmatprep.subr.mxu0 0.0
    %1646 = vmatpush2.msra.mxu0 0.0
    %1647 = vmatprep.mubr.f32.mxu0 0.0
    %v1648 = vand.u32 %v66, 4294901760
    %1649 = vmatmul.mubr.f32.gmra.mxu0 %v1648
    %v1650 = vpop.f32.mrf.mxu0
    %v1651 = vadd.f32 %v1558, %v1650
    %v1652 = vpop.f32.mrf.mxu0
    %v1653 = vadd.f32 %v1560, %v1652
    %1654 = vmatprep.mubr.f32.mxu0 0.0
    %v1655 = vand.u32 %v69, 4294901760
    %1656 = vmatmul.mubr.f32.gmra.mxu0 %v1655
    %v1657 = vpop.f32.mrf.mxu0
    %v1658 = vadd.f32 %v1567, %v1657
    %v1659 = vpop.f32.mrf.mxu0
    %v1660 = vadd.f32 %v1569, %v1659
    %1661 = vdwg.mxu0
    %1662 = vmatprep.subr.mxu0 0.0
    %1663 = vmatpush1.msra.mxu0 0.0
    %1664 = vmatprep.subr.mxu0 0.0
    %1665 = vmatpush1.msra.mxu0 0.0
    %1666 = vmatprep.subr.mxu0 0.0
    %1667 = vmatpush1.msra.mxu0 0.0
    %1668 = vmatprep.subr.mxu0 0.0
    %1669 = vmatpush1.msra.mxu0 0.0
    %1670 = vmatprep.subr.mxu0 0.0
    %1671 = vmatpush1.msra.mxu0 0.0
    %1672 = vmatprep.subr.mxu0 0.0
    %1673 = vmatpush1.msra.mxu0 0.0
    %1674 = vmatprep.subr.mxu0 0.0
    %1675 = vmatpush1.msra.mxu0 0.0
    %1676 = vmatprep.subr.mxu0 0.0
    %1677 = vmatpush1.msra.mxu0 0.0
    %1678 = vmatprep.subr.mxu0 0.0
    %1679 = vmatpush1.msra.mxu0 0.0
    %1680 = vmatprep.subr.mxu0 0.0
    %1681 = vmatpush1.msra.mxu0 0.0
    %1682 = vmatprep.subr.mxu0 0.0
    %1683 = vmatpush1.msra.mxu0 0.0
    %1684 = vmatprep.subr.mxu0 0.0
    %1685 = vmatpush1.msra.mxu0 0.0
    %1686 = vmatprep.subr.mxu0 0.0
    %1687 = vmatpush1.msra.mxu0 0.0
    %1688 = vmatprep.subr.mxu0 0.0
    %1689 = vmatpush1.msra.mxu0 0.0
    %v1690 = vand.u32 %v1204, 4294901760
    %1691 = vmatprep.subr.mxu0 %v1690
    %v1692 = vand.u32 %v1203, 4294901760
    %1693 = vmatpush1.msra.mxu0 %v1692
    %v1694 = vand.u32 %v1202, 4294901760
    %1695 = vmatprep.subr.mxu0 %v1694
    %v1696 = vand.u32 %v1201, 4294901760
    %1697 = vmatpush1.msra.mxu0 %v1696
    %1698 = vmatprep.subr.mxu0 0.0
    %1699 = vmatpush2.msra.mxu0 0.0
    %1700 = vmatprep.subr.mxu0 0.0
    %1701 = vmatpush2.msra.mxu0 0.0
    %1702 = vmatprep.subr.mxu0 0.0
    %1703 = vmatpush2.msra.mxu0 0.0
    %1704 = vmatprep.subr.mxu0 0.0
    %1705 = vmatpush2.msra.mxu0 0.0
    %1706 = vmatprep.subr.mxu0 0.0
    %1707 = vmatpush2.msra.mxu0 0.0
    %1708 = vmatprep.subr.mxu0 0.0
    %1709 = vmatpush2.msra.mxu0 0.0
    %1710 = vmatprep.subr.mxu0 0.0
    %1711 = vmatpush2.msra.mxu0 0.0
    %1712 = vmatprep.subr.mxu0 0.0
    %1713 = vmatpush2.msra.mxu0 0.0
    %1714 = vmatprep.subr.mxu0 0.0
    %1715 = vmatpush2.msra.mxu0 0.0
    %1716 = vmatprep.subr.mxu0 0.0
    %1717 = vmatpush2.msra.mxu0 0.0
    %1718 = vmatprep.subr.mxu0 0.0
    %1719 = vmatpush2.msra.mxu0 0.0
    %1720 = vmatprep.subr.mxu0 0.0
    %1721 = vmatpush2.msra.mxu0 0.0
    %1722 = vmatprep.subr.mxu0 0.0
    %1723 = vmatpush2.msra.mxu0 0.0
    %1724 = vmatprep.subr.mxu0 0.0
    %1725 = vmatpush2.msra.mxu0 0.0
    %1726 = vmatprep.subr.mxu0 0.0
    %1727 = vmatpush2.msra.mxu0 0.0
    %1728 = vmatprep.subr.mxu0 0.0
    %1729 = vmatpush2.msra.mxu0 0.0
    %1730 = vmatprep.mubr.f32.mxu0 0.0
    %v1731 = vand.u32 %v66, 4294901760
    %1732 = vmatmul.mubr.f32.gmra.mxu0 %v1731
    %v1733 = vpop.f32.mrf.mxu0
    %v1734 = vadd.f32 %v1651, %v1733
    %v1735 = vpop.f32.mrf.mxu0
    %v1736 = vadd.f32 %v1653, %v1735
    %1737 = vmatprep.mubr.f32.mxu0 0.0
    %v1738 = vand.u32 %v69, 4294901760
    %1739 = vmatmul.mubr.f32.gmra.mxu0 %v1738
    %v1740 = vpop.f32.mrf.mxu0
    %v1741 = vadd.f32 %v1658, %v1740
    %v1742 = vpop.f32.mrf.mxu0
    %v1743 = vadd.f32 %v1660, %v1742
    %1744 = vdwg.mxu0
    %1745 = vmatprep.subr.mxu0 0.0
    %1746 = vmatpush1.msra.mxu0 0.0
    %1747 = vmatprep.subr.mxu0 0.0
    %1748 = vmatpush1.msra.mxu0 0.0
    %1749 = vmatprep.subr.mxu0 0.0
    %1750 = vmatpush1.msra.mxu0 0.0
    %1751 = vmatprep.subr.mxu0 0.0
    %1752 = vmatpush1.msra.mxu0 0.0
    %1753 = vmatprep.subr.mxu0 0.0
    %1754 = vmatpush1.msra.mxu0 0.0
    %1755 = vmatprep.subr.mxu0 0.0
    %1756 = vmatpush1.msra.mxu0 0.0
    %1757 = vmatprep.subr.mxu0 0.0
    %1758 = vmatpush1.msra.mxu0 0.0
    %1759 = vmatprep.subr.mxu0 0.0
    %1760 = vmatpush1.msra.mxu0 0.0
    %1761 = vmatprep.subr.mxu0 0.0
    %1762 = vmatpush1.msra.mxu0 0.0
    %1763 = vmatprep.subr.mxu0 0.0
    %1764 = vmatpush1.msra.mxu0 0.0
    %1765 = vmatprep.subr.mxu0 0.0
    %1766 = vmatpush1.msra.mxu0 0.0
    %1767 = vmatprep.subr.mxu0 0.0
    %1768 = vmatpush1.msra.mxu0 0.0
    %1769 = vmatprep.subr.mxu0 0.0
    %1770 = vmatpush1.msra.mxu0 0.0
    %1771 = vmatprep.subr.mxu0 0.0
    %1772 = vmatpush1.msra.mxu0 0.0
    %v1773 = vand.u32 %v1204, 4294901760
    %1774 = vmatprep.subr.mxu0 %v1773
    %v1775 = vand.u32 %v1203, 4294901760
    %1776 = vmatpush1.msra.mxu0 %v1775
    %v1777 = vand.u32 %v1202, 4294901760
    %1778 = vmatprep.subr.mxu0 %v1777
    %v1779 = vand.u32 %v1201, 4294901760
    %1780 = vmatpush1.msra.mxu0 %v1779
    %1781 = vmatprep.subr.mxu0 0.0
    %1782 = vmatpush2.msra.mxu0 0.0
    %1783 = vmatprep.subr.mxu0 0.0
    %1784 = vmatpush2.msra.mxu0 0.0
    %1785 = vmatprep.subr.mxu0 0.0
    %1786 = vmatpush2.msra.mxu0 0.0
    %1787 = vmatprep.subr.mxu0 0.0
    %1788 = vmatpush2.msra.mxu0 0.0
    %1789 = vmatprep.subr.mxu0 0.0
    %1790 = vmatpush2.msra.mxu0 0.0
    %1791 = vmatprep.subr.mxu0 0.0
    %1792 = vmatpush2.msra.mxu0 0.0
    %1793 = vmatprep.subr.mxu0 0.0
    %1794 = vmatpush2.msra.mxu0 0.0
    %1795 = vmatprep.subr.mxu0 0.0
    %1796 = vmatpush2.msra.mxu0 0.0
    %1797 = vmatprep.subr.mxu0 0.0
    %1798 = vmatpush2.msra.mxu0 0.0
    %1799 = vmatprep.subr.mxu0 0.0
    %1800 = vmatpush2.msra.mxu0 0.0
    %1801 = vmatprep.subr.mxu0 0.0
    %1802 = vmatpush2.msra.mxu0 0.0
    %1803 = vmatprep.subr.mxu0 0.0
    %1804 = vmatpush2.msra.mxu0 0.0
    %1805 = vmatprep.subr.mxu0 0.0
    %1806 = vmatpush2.msra.mxu0 0.0
    %1807 = vmatprep.subr.mxu0 0.0
    %1808 = vmatpush2.msra.mxu0 0.0
    %1809 = vmatprep.subr.mxu0 0.0
    %1810 = vmatpush2.msra.mxu0 0.0
    %1811 = vmatprep.subr.mxu0 0.0
    %1812 = vmatpush2.msra.mxu0 0.0
    %1813 = vmatprep.mubr.f32.mxu0 0.0
    %v1814 = vand.u32 %v612, 4294901760
    %v1815 = vsub.f32 %v612, %v1814
    %v1816 = vand.u32 %v1815, 4294901760
    %v1817 = vsub.f32 %v1815, %v1816
    %v1818 = vand.u32 %v1817, 4294901760
    %1819 = vmatmul.mubr.f32.gmra.mxu0 %v1818
    %v1820 = vpop.f32.mrf.mxu0
    %v1821 = vadd.f32 0.0, %v1820
    %v1822 = vpop.f32.mrf.mxu0
    %v1823 = vadd.f32 0.0, %v1822
    %1824 = vmatprep.mubr.f32.mxu0 0.0
    %v1825 = vand.u32 %v615, 4294901760
    %v1826 = vsub.f32 %v615, %v1825
    %v1827 = vand.u32 %v1826, 4294901760
    %v1828 = vsub.f32 %v1826, %v1827
    %v1829 = vand.u32 %v1828, 4294901760
    %1830 = vmatmul.mubr.f32.gmra.mxu0 %v1829
    %v1831 = vpop.f32.mrf.mxu0
    %v1832 = vadd.f32 0.0, %v1831
    %v1833 = vpop.f32.mrf.mxu0
    %v1834 = vadd.f32 0.0, %v1833
    %1835 = vdwg.mxu0
    %1836 = vmatprep.subr.mxu0 0.0
    %1837 = vmatpush1.msra.mxu0 0.0
    %1838 = vmatprep.subr.mxu0 0.0
    %1839 = vmatpush1.msra.mxu0 0.0
    %1840 = vmatprep.subr.mxu0 0.0
    %1841 = vmatpush1.msra.mxu0 0.0
    %1842 = vmatprep.subr.mxu0 0.0
    %1843 = vmatpush1.msra.mxu0 0.0
    %1844 = vmatprep.subr.mxu0 0.0
    %1845 = vmatpush1.msra.mxu0 0.0
    %1846 = vmatprep.subr.mxu0 0.0
    %1847 = vmatpush1.msra.mxu0 0.0
    %1848 = vmatprep.subr.mxu0 0.0
    %1849 = vmatpush1.msra.mxu0 0.0
    %1850 = vmatprep.subr.mxu0 0.0
    %1851 = vmatpush1.msra.mxu0 0.0
    %1852 = vmatprep.subr.mxu0 0.0
    %1853 = vmatpush1.msra.mxu0 0.0
    %1854 = vmatprep.subr.mxu0 0.0
    %1855 = vmatpush1.msra.mxu0 0.0
    %1856 = vmatprep.subr.mxu0 0.0
    %1857 = vmatpush1.msra.mxu0 0.0
    %1858 = vmatprep.subr.mxu0 0.0
    %1859 = vmatpush1.msra.mxu0 0.0
    %1860 = vmatprep.subr.mxu0 0.0
    %1861 = vmatpush1.msra.mxu0 0.0
    %1862 = vmatprep.subr.mxu0 0.0
    %1863 = vmatpush1.msra.mxu0 0.0
    %v1864 = vand.u32 %v1204, 4294901760
    %v1865 = vsub.f32 %v1204, %v1864
    %v1866 = vand.u32 %v1865, 4294901760
    %v1867 = vsub.f32 %v1865, %v1866
    %v1868 = vand.u32 %v1867, 4294901760
    %1869 = vmatprep.subr.mxu0 %v1868
    %v1870 = vand.u32 %v1203, 4294901760
    %v1871 = vsub.f32 %v1203, %v1870
    %v1872 = vand.u32 %v1871, 4294901760
    %v1873 = vsub.f32 %v1871, %v1872
    %v1874 = vand.u32 %v1873, 4294901760
    %1875 = vmatpush1.msra.mxu0 %v1874
    %v1876 = vand.u32 %v1202, 4294901760
    %v1877 = vsub.f32 %v1202, %v1876
    %v1878 = vand.u32 %v1877, 4294901760
    %v1879 = vsub.f32 %v1877, %v1878
    %v1880 = vand.u32 %v1879, 4294901760
    %1881 = vmatprep.subr.mxu0 %v1880
    %v1882 = vand.u32 %v1201, 4294901760
    %v1883 = vsub.f32 %v1201, %v1882
    %v1884 = vand.u32 %v1883, 4294901760
    %v1885 = vsub.f32 %v1883, %v1884
    %v1886 = vand.u32 %v1885, 4294901760
    %1887 = vmatpush1.msra.mxu0 %v1886
    %1888 = vmatprep.subr.mxu0 0.0
    %1889 = vmatpush2.msra.mxu0 0.0
    %1890 = vmatprep.subr.mxu0 0.0
    %1891 = vmatpush2.msra.mxu0 0.0
    %1892 = vmatprep.subr.mxu0 0.0
    %1893 = vmatpush2.msra.mxu0 0.0
    %1894 = vmatprep.subr.mxu0 0.0
    %1895 = vmatpush2.msra.mxu0 0.0
    %1896 = vmatprep.subr.mxu0 0.0
    %1897 = vmatpush2.msra.mxu0 0.0
    %1898 = vmatprep.subr.mxu0 0.0
    %1899 = vmatpush2.msra.mxu0 0.0
    %1900 = vmatprep.subr.mxu0 0.0
    %1901 = vmatpush2.msra.mxu0 0.0
    %1902 = vmatprep.subr.mxu0 0.0
    %1903 = vmatpush2.msra.mxu0 0.0
    %1904 = vmatprep.subr.mxu0 0.0
    %1905 = vmatpush2.msra.mxu0 0.0
    %1906 = vmatprep.subr.mxu0 0.0
    %1907 = vmatpush2.msra.mxu0 0.0
    %1908 = vmatprep.subr.mxu0 0.0
    %1909 = vmatpush2.msra.mxu0 0.0
    %1910 = vmatprep.subr.mxu0 0.0
    %1911 = vmatpush2.msra.mxu0 0.0
    %1912 = vmatprep.subr.mxu0 0.0
    %1913 = vmatpush2.msra.mxu0 0.0
    %1914 = vmatprep.subr.mxu0 0.0
    %1915 = vmatpush2.msra.mxu0 0.0
    %1916 = vmatprep.subr.mxu0 0.0
    %1917 = vmatpush2.msra.mxu0 0.0
    %1918 = vmatprep.subr.mxu0 0.0
    %1919 = vmatpush2.msra.mxu0 0.0
    %1920 = vmatprep.mubr.f32.mxu0 0.0
    %v1921 = vand.u32 %v612, 4294901760
    %1922 = vmatmul.mubr.f32.gmra.mxu0 %v1921
    %v1923 = vpop.f32.mrf.mxu0
    %v1924 = vadd.f32 %v1821, %v1923
    %v1925 = vpop.f32.mrf.mxu0
    %v1926 = vadd.f32 %v1823, %v1925
    %1927 = vmatprep.mubr.f32.mxu0 0.0
    %v1928 = vand.u32 %v615, 4294901760
    %1929 = vmatmul.mubr.f32.gmra.mxu0 %v1928
    %v1930 = vpop.f32.mrf.mxu0
    %v1931 = vadd.f32 %v1832, %v1930
    %v1932 = vpop.f32.mrf.mxu0
    %v1933 = vadd.f32 %v1834, %v1932
    %1934 = vdwg.mxu0
    %1935 = vmatprep.subr.mxu0 0.0
    %1936 = vmatpush1.msra.mxu0 0.0
    %1937 = vmatprep.subr.mxu0 0.0
    %1938 = vmatpush1.msra.mxu0 0.0
    %1939 = vmatprep.subr.mxu0 0.0
    %1940 = vmatpush1.msra.mxu0 0.0
    %1941 = vmatprep.subr.mxu0 0.0
    %1942 = vmatpush1.msra.mxu0 0.0
    %1943 = vmatprep.subr.mxu0 0.0
    %1944 = vmatpush1.msra.mxu0 0.0
    %1945 = vmatprep.subr.mxu0 0.0
    %1946 = vmatpush1.msra.mxu0 0.0
    %1947 = vmatprep.subr.mxu0 0.0
    %1948 = vmatpush1.msra.mxu0 0.0
    %1949 = vmatprep.subr.mxu0 0.0
    %1950 = vmatpush1.msra.mxu0 0.0
    %1951 = vmatprep.subr.mxu0 0.0
    %1952 = vmatpush1.msra.mxu0 0.0
    %1953 = vmatprep.subr.mxu0 0.0
    %1954 = vmatpush1.msra.mxu0 0.0
    %1955 = vmatprep.subr.mxu0 0.0
    %1956 = vmatpush1.msra.mxu0 0.0
    %1957 = vmatprep.subr.mxu0 0.0
    %1958 = vmatpush1.msra.mxu0 0.0
    %1959 = vmatprep.subr.mxu0 0.0
    %1960 = vmatpush1.msra.mxu0 0.0
    %1961 = vmatprep.subr.mxu0 0.0
    %1962 = vmatpush1.msra.mxu0 0.0
    %v1963 = vand.u32 %v1204, 4294901760
    %v1964 = vsub.f32 %v1204, %v1963
    %1965 = vmatprep.subr.mxu0 %v1964
    %v1966 = vand.u32 %v1203, 4294901760
    %v1967 = vsub.f32 %v1203, %v1966
    %1968 = vmatpush1.msra.mxu0 %v1967
    %v1969 = vand.u32 %v1202, 4294901760
    %v1970 = vsub.f32 %v1202, %v1969
    %1971 = vmatprep.subr.mxu0 %v1970
    %v1972 = vand.u32 %v1201, 4294901760
    %v1973 = vsub.f32 %v1201, %v1972
    %1974 = vmatpush1.msra.mxu0 %v1973
    %1975 = vmatprep.subr.mxu0 0.0
    %1976 = vmatpush2.msra.mxu0 0.0
    %1977 = vmatprep.subr.mxu0 0.0
    %1978 = vmatpush2.msra.mxu0 0.0
    %1979 = vmatprep.subr.mxu0 0.0
    %1980 = vmatpush2.msra.mxu0 0.0
    %1981 = vmatprep.subr.mxu0 0.0
    %1982 = vmatpush2.msra.mxu0 0.0
    %1983 = vmatprep.subr.mxu0 0.0
    %1984 = vmatpush2.msra.mxu0 0.0
    %1985 = vmatprep.subr.mxu0 0.0
    %1986 = vmatpush2.msra.mxu0 0.0
    %1987 = vmatprep.subr.mxu0 0.0
    %1988 = vmatpush2.msra.mxu0 0.0
    %1989 = vmatprep.subr.mxu0 0.0
    %1990 = vmatpush2.msra.mxu0 0.0
    %1991 = vmatprep.subr.mxu0 0.0
    %1992 = vmatpush2.msra.mxu0 0.0
    %1993 = vmatprep.subr.mxu0 0.0
    %1994 = vmatpush2.msra.mxu0 0.0
    %1995 = vmatprep.subr.mxu0 0.0
    %1996 = vmatpush2.msra.mxu0 0.0
    %1997 = vmatprep.subr.mxu0 0.0
    %1998 = vmatpush2.msra.mxu0 0.0
    %1999 = vmatprep.subr.mxu0 0.0
    %2000 = vmatpush2.msra.mxu0 0.0
    %2001 = vmatprep.subr.mxu0 0.0
    %2002 = vmatpush2.msra.mxu0 0.0
    %2003 = vmatprep.subr.mxu0 0.0
    %2004 = vmatpush2.msra.mxu0 0.0
    %2005 = vmatprep.subr.mxu0 0.0
    %2006 = vmatpush2.msra.mxu0 0.0
    %2007 = vmatprep.mubr.f32.mxu0 0.0
    %v2008 = vand.u32 %v612, 4294901760
    %v2009 = vsub.f32 %v612, %v2008
    %2010 = vmatmul.mubr.f32.gmra.mxu0 %v2009
    %v2011 = vpop.f32.mrf.mxu0
    %v2012 = vadd.f32 %v1924, %v2011
    %v2013 = vpop.f32.mrf.mxu0
    %v2014 = vadd.f32 %v1926, %v2013
    %2015 = vmatprep.mubr.f32.mxu0 0.0
    %v2016 = vand.u32 %v615, 4294901760
    %v2017 = vsub.f32 %v615, %v2016
    %2018 = vmatmul.mubr.f32.gmra.mxu0 %v2017
    %v2019 = vpop.f32.mrf.mxu0
    %v2020 = vadd.f32 %v1931, %v2019
    %v2021 = vpop.f32.mrf.mxu0
    %v2022 = vadd.f32 %v1933, %v2021
    %2023 = vdwg.mxu0
    %2024 = vmatprep.subr.mxu0 0.0
    %2025 = vmatpush1.msra.mxu0 0.0
    %2026 = vmatprep.subr.mxu0 0.0
    %2027 = vmatpush1.msra.mxu0 0.0
    %2028 = vmatprep.subr.mxu0 0.0
    %2029 = vmatpush1.msra.mxu0 0.0
    %2030 = vmatprep.subr.mxu0 0.0
    %2031 = vmatpush1.msra.mxu0 0.0
    %2032 = vmatprep.subr.mxu0 0.0
    %2033 = vmatpush1.msra.mxu0 0.0
    %2034 = vmatprep.subr.mxu0 0.0
    %2035 = vmatpush1.msra.mxu0 0.0
    %2036 = vmatprep.subr.mxu0 0.0
    %2037 = vmatpush1.msra.mxu0 0.0
    %2038 = vmatprep.subr.mxu0 0.0
    %2039 = vmatpush1.msra.mxu0 0.0
    %2040 = vmatprep.subr.mxu0 0.0
    %2041 = vmatpush1.msra.mxu0 0.0
    %2042 = vmatprep.subr.mxu0 0.0
    %2043 = vmatpush1.msra.mxu0 0.0
    %2044 = vmatprep.subr.mxu0 0.0
    %2045 = vmatpush1.msra.mxu0 0.0
    %2046 = vmatprep.subr.mxu0 0.0
    %2047 = vmatpush1.msra.mxu0 0.0
    %2048 = vmatprep.subr.mxu0 0.0
    %2049 = vmatpush1.msra.mxu0 0.0
    %2050 = vmatprep.subr.mxu0 0.0
    %2051 = vmatpush1.msra.mxu0 0.0
    %v2052 = vand.u32 %v1204, 4294901760
    %2053 = vmatprep.subr.mxu0 %v2052
    %v2054 = vand.u32 %v1203, 4294901760
    %2055 = vmatpush1.msra.mxu0 %v2054
    %v2056 = vand.u32 %v1202, 4294901760
    %2057 = vmatprep.subr.mxu0 %v2056
    %v2058 = vand.u32 %v1201, 4294901760
    %2059 = vmatpush1.msra.mxu0 %v2058
    %2060 = vmatprep.subr.mxu0 0.0
    %2061 = vmatpush2.msra.mxu0 0.0
    %2062 = vmatprep.subr.mxu0 0.0
    %2063 = vmatpush2.msra.mxu0 0.0
    %2064 = vmatprep.subr.mxu0 0.0
    %2065 = vmatpush2.msra.mxu0 0.0
    %2066 = vmatprep.subr.mxu0 0.0
    %2067 = vmatpush2.msra.mxu0 0.0
    %2068 = vmatprep.subr.mxu0 0.0
    %2069 = vmatpush2.msra.mxu0 0.0
    %2070 = vmatprep.subr.mxu0 0.0
    %2071 = vmatpush2.msra.mxu0 0.0
    %2072 = vmatprep.subr.mxu0 0.0
    %2073 = vmatpush2.msra.mxu0 0.0
    %2074 = vmatprep.subr.mxu0 0.0
    %2075 = vmatpush2.msra.mxu0 0.0
    %2076 = vmatprep.subr.mxu0 0.0
    %2077 = vmatpush2.msra.mxu0 0.0
    %2078 = vmatprep.subr.mxu0 0.0
    %2079 = vmatpush2.msra.mxu0 0.0
    %2080 = vmatprep.subr.mxu0 0.0
    %2081 = vmatpush2.msra.mxu0 0.0
    %2082 = vmatprep.subr.mxu0 0.0
    %2083 = vmatpush2.msra.mxu0 0.0
    %2084 = vmatprep.subr.mxu0 0.0
    %2085 = vmatpush2.msra.mxu0 0.0
    %2086 = vmatprep.subr.mxu0 0.0
    %2087 = vmatpush2.msra.mxu0 0.0
    %2088 = vmatprep.subr.mxu0 0.0
    %2089 = vmatpush2.msra.mxu0 0.0
    %2090 = vmatprep.subr.mxu0 0.0
    %2091 = vmatpush2.msra.mxu0 0.0
    %2092 = vmatprep.mubr.f32.mxu0 0.0
    %v2093 = vand.u32 %v612, 4294901760
    %v2094 = vsub.f32 %v612, %v2093
    %v2095 = vand.u32 %v2094, 4294901760
    %2096 = vmatmul.mubr.f32.gmra.mxu0 %v2095
    %v2097 = vpop.f32.mrf.mxu0
    %v2098 = vadd.f32 %v2012, %v2097
    %v2099 = vpop.f32.mrf.mxu0
    %v2100 = vadd.f32 %v2014, %v2099
    %2101 = vmatprep.mubr.f32.mxu0 0.0
    %v2102 = vand.u32 %v615, 4294901760
    %v2103 = vsub.f32 %v615, %v2102
    %v2104 = vand.u32 %v2103, 4294901760
    %2105 = vmatmul.mubr.f32.gmra.mxu0 %v2104
    %v2106 = vpop.f32.mrf.mxu0
    %v2107 = vadd.f32 %v2020, %v2106
    %v2108 = vpop.f32.mrf.mxu0
    %v2109 = vadd.f32 %v2022, %v2108
    %2110 = vdwg.mxu0
    %2111 = vmatprep.subr.mxu0 0.0
    %2112 = vmatpush1.msra.mxu0 0.0
    %2113 = vmatprep.subr.mxu0 0.0
    %2114 = vmatpush1.msra.mxu0 0.0
    %2115 = vmatprep.subr.mxu0 0.0
    %2116 = vmatpush1.msra.mxu0 0.0
    %2117 = vmatprep.subr.mxu0 0.0
    %2118 = vmatpush1.msra.mxu0 0.0
    %2119 = vmatprep.subr.mxu0 0.0
    %2120 = vmatpush1.msra.mxu0 0.0
    %2121 = vmatprep.subr.mxu0 0.0
    %2122 = vmatpush1.msra.mxu0 0.0
    %2123 = vmatprep.subr.mxu0 0.0
    %2124 = vmatpush1.msra.mxu0 0.0
    %2125 = vmatprep.subr.mxu0 0.0
    %2126 = vmatpush1.msra.mxu0 0.0
    %2127 = vmatprep.subr.mxu0 0.0
    %2128 = vmatpush1.msra.mxu0 0.0
    %2129 = vmatprep.subr.mxu0 0.0
    %2130 = vmatpush1.msra.mxu0 0.0
    %2131 = vmatprep.subr.mxu0 0.0
    %2132 = vmatpush1.msra.mxu0 0.0
    %2133 = vmatprep.subr.mxu0 0.0
    %2134 = vmatpush1.msra.mxu0 0.0
    %2135 = vmatprep.subr.mxu0 0.0
    %2136 = vmatpush1.msra.mxu0 0.0
    %2137 = vmatprep.subr.mxu0 0.0
    %2138 = vmatpush1.msra.mxu0 0.0
    %v2139 = vand.u32 %v1204, 4294901760
    %v2140 = vsub.f32 %v1204, %v2139
    %v2141 = vand.u32 %v2140, 4294901760
    %2142 = vmatprep.subr.mxu0 %v2141
    %v2143 = vand.u32 %v1203, 4294901760
    %v2144 = vsub.f32 %v1203, %v2143
    %v2145 = vand.u32 %v2144, 4294901760
    %2146 = vmatpush1.msra.mxu0 %v2145
    %v2147 = vand.u32 %v1202, 4294901760
    %v2148 = vsub.f32 %v1202, %v2147
    %v2149 = vand.u32 %v2148, 4294901760
    %2150 = vmatprep.subr.mxu0 %v2149
    %v2151 = vand.u32 %v1201, 4294901760
    %v2152 = vsub.f32 %v1201, %v2151
    %v2153 = vand.u32 %v2152, 4294901760
    %2154 = vmatpush1.msra.mxu0 %v2153
    %2155 = vmatprep.subr.mxu0 0.0
    %2156 = vmatpush2.msra.mxu0 0.0
    %2157 = vmatprep.subr.mxu0 0.0
    %2158 = vmatpush2.msra.mxu0 0.0
    %2159 = vmatprep.subr.mxu0 0.0
    %2160 = vmatpush2.msra.mxu0 0.0
    %2161 = vmatprep.subr.mxu0 0.0
    %2162 = vmatpush2.msra.mxu0 0.0
    %2163 = vmatprep.subr.mxu0 0.0
    %2164 = vmatpush2.msra.mxu0 0.0
    %2165 = vmatprep.subr.mxu0 0.0
    %2166 = vmatpush2.msra.mxu0 0.0
    %2167 = vmatprep.subr.mxu0 0.0
    %2168 = vmatpush2.msra.mxu0 0.0
    %2169 = vmatprep.subr.mxu0 0.0
    %2170 = vmatpush2.msra.mxu0 0.0
    %2171 = vmatprep.subr.mxu0 0.0
    %2172 = vmatpush2.msra.mxu0 0.0
    %2173 = vmatprep.subr.mxu0 0.0
    %2174 = vmatpush2.msra.mxu0 0.0
    %2175 = vmatprep.subr.mxu0 0.0
    %2176 = vmatpush2.msra.mxu0 0.0
    %2177 = vmatprep.subr.mxu0 0.0
    %2178 = vmatpush2.msra.mxu0 0.0
    %2179 = vmatprep.subr.mxu0 0.0
    %2180 = vmatpush2.msra.mxu0 0.0
    %2181 = vmatprep.subr.mxu0 0.0
    %2182 = vmatpush2.msra.mxu0 0.0
    %2183 = vmatprep.subr.mxu0 0.0
    %2184 = vmatpush2.msra.mxu0 0.0
    %2185 = vmatprep.subr.mxu0 0.0
    %2186 = vmatpush2.msra.mxu0 0.0
    %2187 = vmatprep.mubr.f32.mxu0 0.0
    %v2188 = vand.u32 %v612, 4294901760
    %2189 = vmatmul.mubr.f32.gmra.mxu0 %v2188
    %v2190 = vpop.f32.mrf.mxu0
    %v2191 = vadd.f32 %v2098, %v2190
    %v2192 = vpop.f32.mrf.mxu0
    %v2193 = vadd.f32 %v2100, %v2192
    %2194 = vmatprep.mubr.f32.mxu0 0.0
    %v2195 = vand.u32 %v615, 4294901760
    %2196 = vmatmul.mubr.f32.gmra.mxu0 %v2195
    %v2197 = vpop.f32.mrf.mxu0
    %v2198 = vadd.f32 %v2107, %v2197
    %v2199 = vpop.f32.mrf.mxu0
    %v2200 = vadd.f32 %v2109, %v2199
    %2201 = vdwg.mxu0
    %2202 = vmatprep.subr.mxu0 0.0
    %2203 = vmatpush1.msra.mxu0 0.0
    %2204 = vmatprep.subr.mxu0 0.0
    %2205 = vmatpush1.msra.mxu0 0.0
    %2206 = vmatprep.subr.mxu0 0.0
    %2207 = vmatpush1.msra.mxu0 0.0
    %2208 = vmatprep.subr.mxu0 0.0
    %2209 = vmatpush1.msra.mxu0 0.0
    %2210 = vmatprep.subr.mxu0 0.0
    %2211 = vmatpush1.msra.mxu0 0.0
    %2212 = vmatprep.subr.mxu0 0.0
    %2213 = vmatpush1.msra.mxu0 0.0
    %2214 = vmatprep.subr.mxu0 0.0
    %2215 = vmatpush1.msra.mxu0 0.0
    %2216 = vmatprep.subr.mxu0 0.0
    %2217 = vmatpush1.msra.mxu0 0.0
    %2218 = vmatprep.subr.mxu0 0.0
    %2219 = vmatpush1.msra.mxu0 0.0
    %2220 = vmatprep.subr.mxu0 0.0
    %2221 = vmatpush1.msra.mxu0 0.0
    %2222 = vmatprep.subr.mxu0 0.0
    %2223 = vmatpush1.msra.mxu0 0.0
    %2224 = vmatprep.subr.mxu0 0.0
    %2225 = vmatpush1.msra.mxu0 0.0
    %2226 = vmatprep.subr.mxu0 0.0
    %2227 = vmatpush1.msra.mxu0 0.0
    %2228 = vmatprep.subr.mxu0 0.0
    %2229 = vmatpush1.msra.mxu0 0.0
    %v2230 = vand.u32 %v1204, 4294901760
    %2231 = vmatprep.subr.mxu0 %v2230
    %v2232 = vand.u32 %v1203, 4294901760
    %2233 = vmatpush1.msra.mxu0 %v2232
    %v2234 = vand.u32 %v1202, 4294901760
    %2235 = vmatprep.subr.mxu0 %v2234
    %v2236 = vand.u32 %v1201, 4294901760
    %2237 = vmatpush1.msra.mxu0 %v2236
    %2238 = vmatprep.subr.mxu0 0.0
    %2239 = vmatpush2.msra.mxu0 0.0
    %2240 = vmatprep.subr.mxu0 0.0
    %2241 = vmatpush2.msra.mxu0 0.0
    %2242 = vmatprep.subr.mxu0 0.0
    %2243 = vmatpush2.msra.mxu0 0.0
    %2244 = vmatprep.subr.mxu0 0.0
    %2245 = vmatpush2.msra.mxu0 0.0
    %2246 = vmatprep.subr.mxu0 0.0
    %2247 = vmatpush2.msra.mxu0 0.0
    %2248 = vmatprep.subr.mxu0 0.0
    %2249 = vmatpush2.msra.mxu0 0.0
    %2250 = vmatprep.subr.mxu0 0.0
    %2251 = vmatpush2.msra.mxu0 0.0
    %2252 = vmatprep.subr.mxu0 0.0
    %2253 = vmatpush2.msra.mxu0 0.0
    %2254 = vmatprep.subr.mxu0 0.0
    %2255 = vmatpush2.msra.mxu0 0.0
    %2256 = vmatprep.subr.mxu0 0.0
    %2257 = vmatpush2.msra.mxu0 0.0
    %2258 = vmatprep.subr.mxu0 0.0
    %2259 = vmatpush2.msra.mxu0 0.0
    %2260 = vmatprep.subr.mxu0 0.0
    %2261 = vmatpush2.msra.mxu0 0.0
    %2262 = vmatprep.subr.mxu0 0.0
    %2263 = vmatpush2.msra.mxu0 0.0
    %2264 = vmatprep.subr.mxu0 0.0
    %2265 = vmatpush2.msra.mxu0 0.0
    %2266 = vmatprep.subr.mxu0 0.0
    %2267 = vmatpush2.msra.mxu0 0.0
    %2268 = vmatprep.subr.mxu0 0.0
    %2269 = vmatpush2.msra.mxu0 0.0
    %2270 = vmatprep.mubr.f32.mxu0 0.0
    %v2271 = vand.u32 %v612, 4294901760
    %2272 = vmatmul.mubr.f32.gmra.mxu0 %v2271
    %v2273 = vpop.f32.mrf.mxu0
    %v2274 = vadd.f32 %v2191, %v2273
    %v2275 = vpop.f32.mrf.mxu0
    %v2276 = vadd.f32 %v2193, %v2275
    %2277 = vmatprep.mubr.f32.mxu0 0.0
    %v2278 = vand.u32 %v615, 4294901760
    %2279 = vmatmul.mubr.f32.gmra.mxu0 %v2278
    %v2280 = vpop.f32.mrf.mxu0
    %v2281 = vadd.f32 %v2198, %v2280
    %v2282 = vpop.f32.mrf.mxu0
    %v2283 = vadd.f32 %v2200, %v2282
    %2284 = vdwg.mxu0
    %v2285 = vlaneseq
    %v2286 = vshrl.u32 %v2285, 7
    %v2287 = vsub.s32 1, %v2286
    %v2288 = vrot.slane %v1159, %v2287
    %v2289 = vlaneseq
    %v2290 = vshrl.u32 %v2289, 7
    %v2291 = vsub.s32 3, %v2290
    %v2292 = vrot.slane %v1159, %v2291
    %v2293 = vlaneseq
    %v2294 = vshrl.u32 %v2293, 7
    %v2295 = vsub.s32 1, %v2294
    %v2296 = vrot.slane %v2288, %v2295
    %v2297 = vlaneseq
    %v2298 = vshrl.u32 %v2297, 7
    %v2299 = vsub.s32 1, %v2298
    %v2300 = vrot.slane %v2292, %v2299
    %vm2301 = vcmp.eq.s32.totalorder %v2296, 1
    %vm2302 = vcmp.eq.s32.totalorder %v2300, 1
    %v2303 = vsel %vm2301, %v2274, %v1201
    %v2304 = vsel %vm2302, %v2276, %v1202
    %v2305 = vsel %vm2301, %v2281, %v1203
    %v2306 = vsel %vm2302, %v2283, %v1204
    %v2307 = vlaneseq
    %v2308 = vshrl.u32 %v2307, 7
    %v2309 = vsub.s32 1, %v2308
    %v2310 = vrot.slane %v1182, %v2309
    %v2311 = vlaneseq
    %v2312 = vshrl.u32 %v2311, 7
    %v2313 = vsub.s32 3, %v2312
    %v2314 = vrot.slane %v1182, %v2313
    %v2315 = vlaneseq
    %v2316 = vshrl.u32 %v2315, 7
    %v2317 = vsub.s32 1, %v2316
    %v2318 = vrot.slane %v2310, %v2317
    %v2319 = vlaneseq
    %v2320 = vshrl.u32 %v2319, 7
    %v2321 = vsub.s32 1, %v2320
    %v2322 = vrot.slane %v2314, %v2321
    %vm2323 = vcmp.eq.s32.totalorder %v2318, 1
    %vm2324 = vcmp.eq.s32.totalorder %v2322, 1
    %v2325 = vsel %vm2323, %v1734, %v2303
    %v2326 = vsel %vm2324, %v1736, %v2304
    %v2327 = vsel %vm2323, %v1741, %v2305
    %v2328 = vsel %vm2324, %v1743, %v2306
    %2329 = vst [vmem:[#allocation8] sm:$0xff] %v2325
    %2330 = vst [vmem:[#allocation8 + $0x8] sm:$0xff] %v2326
    %2331 = vst [vmem:[#allocation8 + $0x10] sm:$0xff] %v2327
    %2332 = vst [vmem:[#allocation8 + $0x18] sm:$0xff] %v2328
    // Predicated region
    $region26: #{tpu_custom_call.1} parent=1 // pred_check
      _
    $region27: #{tpu_custom_call.1} parent=1 // pred_check_branch
      %2334 = sbr.rel (0) target = $region29
    $region28: #{tpu_custom_call.1} parent=1 // pred_region
      %s2336 = ssub.s32 512, 512
      %2337 = vsyncadd [#allocation4], %s2336
      %s2338 = sshll.u32 [#allocation8], 4
      %s2339 = int_to_ptr.vmem [resolvable:$true] %s2338
      %2344 = dma.vmem_to_hbm [thread:$0]  %s2339, 512, %s3, [#allocation4], 256, 256, 16
    $region29: #{tpu_custom_call.1} parent=1 // pred_fallthru
      _
    // Predicated region
    $region30: #{tpu_custom_call.1} parent=1 // pred_check
      _
    $region31: #{tpu_custom_call.1} parent=1 // pred_check_branch
      %2346 = sbr.rel (0) target = $region33
    $region32: #{tpu_custom_call.1} parent=1 // pred_region
      %2347 = dma.done [#allocation4], 512
    $region33: #{tpu_custom_call.1} parent=1 // pred_fallthru
      _
    %2348 = vsyncpa [#allocation3], 1
    %2349 = vsyncpa [#allocation6], 1
    %2350 = vsyncpa [#allocation4], 1

</llo_original>
